<compile_context>
chip_gen: v6e
topology: v6e:2x2x1
jax: 0.10.0
libtpu: 0.0.40
codegen_flags: <defaults>
</compile_context>

<pallas_src>
import functools

import numpy as np
import jax
import jax.numpy as jnp
from jax.experimental import pallas as pl
from jax.experimental.pallas import tpu as pltpu


# ----------------------------------------------------------------------------
# In-kernel helper: training-mode BatchNorm + ReLU over a list of (C, M_i)
# slabs (statistics over the union of all columns, per channel row).
# ----------------------------------------------------------------------------
def _bn_relu(slabs, gamma, beta, eps):
    count = sum(s.shape[1] for s in slabs)
    inv = 1.0 / float(count)
    mean = sum(jnp.sum(s, axis=1, keepdims=True) for s in slabs) * inv
    var = sum(jnp.sum((s - mean) ** 2, axis=1, keepdims=True) for s in slabs) * inv
    scale = gamma * jax.lax.rsqrt(var + eps)          # EUP rsqrt
    shift = beta - mean * scale
    return [jnp.maximum(s * scale + shift, 0.0) for s in slabs]


# ----------------------------------------------------------------------------
# Fused decoder kernel.
# ----------------------------------------------------------------------------
def _decoder_kernel(x_ref, w1_ref, wt_ref, w2_ref, masks_ref,
                    g1_ref, b1_ref, g2_ref, b2_ref, g3_ref, b3_ref,
                    o_ref, mid_ref,
                    *, taps_per_phase, mask_is_full, margin_lo, eps):
    cmid = w1_ref.shape[0]
    m = x_ref.shape[1]                                 # N*H*W pixels on lanes

    # ---- conv1: 1x1 conv == (Cmid, Cin) @ (Cin, M), then BN + ReLU ----------
    y1 = jnp.dot(w1_ref[...], x_ref[...], preferred_element_type=jnp.float32)
    (y1,) = _bn_relu([y1], g1_ref[...], b1_ref[...], eps)

    # Stage the activation in a zero-margined flat VMEM scratch so every tap
    # of the transposed conv is a plain shifted slice read (no zero-inserted
    # upsampled tensor, no HBM round trip).
    mid_ref[...] = jnp.zeros(mid_ref.shape, jnp.float32)
    mid_ref[:, margin_lo:margin_lo + m] = y1

    # ---- tp_conv: phase-decomposed ConvTranspose2d --------------------------
    slabs = []
    for taps in taps_per_phase:                        # static: s*s phases
        acc = jnp.zeros((cmid, m), jnp.float32)
        for w_idx, delta, mask_id in taps:             # static: <= k*k taps
            start = margin_lo + delta
            xs = mid_ref[:, start:start + m]           # shifted read
            if not mask_is_full[mask_id]:
                xs = xs * masks_ref[pl.ds(mask_id, 1), :]   # boundary mask
            acc = acc + jnp.dot(wt_ref[w_idx], xs,
                                preferred_element_type=jnp.float32)
        slabs.append(acc)
    slabs = _bn_relu(slabs, g2_ref[...], b2_ref[...], eps)

    # ---- conv2: 1x1 conv + BN + ReLU ----------------------------------------
    outs = [jnp.dot(w2_ref[...], s, preferred_element_type=jnp.float32)
            for s in slabs]
    outs = _bn_relu(outs, g3_ref[...], b3_ref[...], eps)

    # lane-dense output: each phase owns a 128-aligned lane range
    for ph, s in enumerate(outs):
        o_ref[:, ph * m:(ph + 1) * m] = s


# ----------------------------------------------------------------------------
# Host wrapper: static tap schedule + lane-dense operands + single pallas_call.
# ----------------------------------------------------------------------------
def decoder_forward(x_nchw, params, kernel_size, stride, padding,
                    output_padding, eps=1e-5):
    n, cin, h, w = x_nchw.shape
    k, s, p, op = kernel_size, stride, padding, output_padding
    cmid = params["w1"].shape[0]
    cout = params["w2"].shape[0]
    ho = (h - 1) * s - 2 * p + k + op
    wo = (w - 1) * s - 2 * p + k + op
    # TODO(synk): the phase decomposition assumes every output phase grid has
    # the input extent (Ho == s*H, Wo == s*W) -- true for the standard LinkNet
    # decoder config (k=3, s=2, p=1, op=1). Other geometries need per-phase
    # grids / extra padding.
    assert ho == s * h and wo == s * w, "unsupported conv-transpose geometry"
    m = n * h * w

    # Static schedule: phase (ry, rx) covers output pixels with oy%s==ry,
    # ox%s==rx.  Tap (dy, dx) contributes w_t[:,:,dy,dx]^T @ x[:, qy+offy,
    # qx+offx] with offy = (ry + p - dy)//s (only when divisible), which in
    # the flattened (n, qy, qx) pixel axis is a shift by delta = offy*W+offx.
    offset_ids = {}
    taps_per_phase = []
    deltas = [0]
    for ry in range(s):
        for rx in range(s):
            taps = []
            for dy in range((ry + p) % s, k, s):
                offy = (ry + p - dy) // s
                for dx in range((rx + p) % s, k, s):
                    offx = (rx + p - dx) // s
                    key = (offy, offx)
                    if key not in offset_ids:
                        offset_ids[key] = len(offset_ids)
                    deltas.append(offy * w + offx)
                    taps.append((dy * k + dx, offy * w + offx, offset_ids[key]))
            taps_per_phase.append(tuple(taps))
    n_phase = s * s
    margin_lo = max(0, -min(deltas))
    margin_hi = max(0, max(deltas))
    m_pad = -(-(m + margin_lo + margin_hi) // 128) * 128

    # Boundary masks (one row per distinct (offy, offx)), built on the host.
    n_masks = max(1, len(offset_ids))
    masks_np = np.zeros((n_masks, m), np.float32)
    pix = np.arange(m)
    qx = pix % w
    qy = (pix // w) % h
    for (offy, offx), t in offset_ids.items():
        ok = ((qx + offx >= 0) & (qx + offx < w) &
              (qy + offy >= 0) & (qy + offy < h))
        masks_np[t] = ok.astype(np.float32)
    mask_is_full = tuple(bool(masks_np[t].all()) for t in range(n_masks))
    masks = jnp.asarray(masks_np)

    # Lane-dense operands: channels on sublanes, flattened pixels on lanes.
    x_cm = jnp.transpose(x_nchw.astype(jnp.float32), (1, 0, 2, 3)).reshape(cin, m)
    # per-tap matrices: wtaps[dy*k+dx] = w_t[:, :, dy, dx]^T  -> (Cout_m, Cin_m)
    wtaps = jnp.transpose(params["wt"].astype(jnp.float32), (2, 3, 1, 0))
    wtaps = wtaps.reshape(k * k, cmid, cmid)
    w1 = params["w1"].astype(jnp.float32)               # (Cmid, Cin)
    w2 = params["w2"].astype(jnp.float32)               # (Cout, Cmid)
    col = lambda v: v.astype(jnp.float32).reshape(-1, 1)

    kern = functools.partial(
        _decoder_kernel,
        taps_per_phase=tuple(taps_per_phase),
        mask_is_full=mask_is_full,
        margin_lo=margin_lo,
        eps=float(eps),
    )

    out_flat = pl.pallas_call(
        kern,
        out_shape=jax.ShapeDtypeStruct((cout, n_phase * m), jnp.float32),
        grid_spec=pltpu.PrefetchScalarGridSpec(
            num_scalar_prefetch=0,
            grid=(1,),
            in_specs=[
                pl.BlockSpec((cin, m), lambda i: (0, 0)),
                pl.BlockSpec((cmid, cin), lambda i: (0, 0)),
                pl.BlockSpec((k * k, cmid, cmid), lambda i: (0, 0, 0)),
                pl.BlockSpec((cout, cmid), lambda i: (0, 0)),
                pl.BlockSpec((n_masks, m), lambda i: (0, 0)),
                pl.BlockSpec((cmid, 1), lambda i: (0, 0)),
                pl.BlockSpec((cmid, 1), lambda i: (0, 0)),
                pl.BlockSpec((cmid, 1), lambda i: (0, 0)),
                pl.BlockSpec((cmid, 1), lambda i: (0, 0)),
                pl.BlockSpec((cout, 1), lambda i: (0, 0)),
                pl.BlockSpec((cout, 1), lambda i: (0, 0)),
            ],
            out_specs=pl.BlockSpec((cout, n_phase * m), lambda i: (0, 0)),
            scratch_shapes=[pltpu.VMEM((cmid, m_pad), jnp.float32)]),
        compiler_params=pltpu.CompilerParams(
            dimension_semantics=("arbitrary",)),
    )(x_cm, w1, wtaps, w2, masks,
      col(params["g1"]), col(params["b1"]),
      col(params["g2"]), col(params["b2"]),
      col(params["g3"]), col(params["b3"]))

    # De-interleave the s*s output phases back to NCHW (cheap XLA glue on the
    # final output only).  Column index = ((ry*s+rx)*N + n)*H*W + qy*W + qx.
    out = out_flat.reshape(cout, s, s, n, h, w)
    out = jnp.transpose(out, (3, 0, 4, 1, 5, 2)).reshape(n, cout, ho, wo)
    return out


# ----------------------------------------------------------------------------
# Pure-JAX reference (training-mode BN, ConvTranspose2d via dilated conv with
# the spatially flipped kernel) -- used to validate the fused kernel.
# ----------------------------------------------------------------------------
def _bn_relu_ref(x, g, b, eps):
    mean = jnp.mean(x, axis=(0, 2, 3), keepdims=True)
    var = jnp.mean((x - mean) ** 2, axis=(0, 2, 3), keepdims=True)
    scale = g.reshape(1, -1, 1, 1) * jax.lax.rsqrt(var + eps)
    shift = b.reshape(1, -1, 1, 1) - mean * scale
    return jnp.maximum(x * scale + shift, 0.0)


def decoder_reference(x_nchw, params, kernel_size, stride, padding,
                      output_padding, eps=1e-5):
    k, s, p, op = kernel_size, stride, padding, output_padding
    hp = jax.lax.Precision.HIGHEST
    x = x_nchw.astype(jnp.float32)
    y = jnp.einsum("oc,nchw->nohw", params["w1"], x, precision=hp)
    y = _bn_relu_ref(y, params["g1"], params["b1"], eps)
    w_conv = jnp.flip(params["wt"], (2, 3)).transpose(1, 0, 2, 3)   # OIHW
    lo = k - 1 - p
    y = jax.lax.conv_general_dilated(
        y, w_conv, window_strides=(1, 1),
        padding=[(lo, lo + op), (lo, lo + op)],
        lhs_dilation=(s, s),
        dimension_numbers=("NCHW", "OIHW", "NCHW"),
        precision=hp)
    y = _bn_relu_ref(y, params["g2"], params["b2"], eps)
    z = jnp.einsum("oc,nchw->nohw", params["w2"], y, precision=hp)
    return _bn_relu_ref(z, params["g3"], params["b3"], eps)


if __name__ == "__main__":
    # Decoder(in_planes=32, out_planes=16, kernel_size=3, stride=2,
    #         padding=1, output_padding=1, bias=False)
    in_planes, out_planes = 32, 16
    kernel_size, stride, padding, output_padding = 3, 2, 1, 1
    n, h, w = 2, 8, 8
    cmid = in_planes // 4

    key = jax.random.PRNGKey(0)
    ks = jax.random.split(key, 8)
    x = jax.random.normal(ks[0], (n, in_planes, h, w), jnp.float32)

    params = dict(
        # conv1 weight (Cmid, Cin)  (PyTorch (Cmid, Cin, 1, 1) squeezed)
        w1=0.1 * jax.random.normal(ks[1], (cmid, in_planes), jnp.float32),
        # ConvTranspose2d weight: (in_ch, out_ch, kH, kW)
        wt=0.1 * jax.random.normal(
            ks[2], (cmid, cmid, kernel_size, kernel_size), jnp.float32),
        # conv2 weight (Cout, Cmid)
        w2=0.1 * jax.random.normal(ks[3], (out_planes, cmid), jnp.float32),
        # BatchNorm affine params (non-trivial so the check is meaningful)
        g1=1.0 + 0.1 * jax.random.normal(ks[4], (cmid,), jnp.float32),
        b1=0.1 * jax.random.normal(ks[5], (cmid,), jnp.float32),
        g2=1.0 + 0.1 * jax.random.normal(ks[6], (cmid,), jnp.float32),
        b2=jnp.zeros((cmid,), jnp.float32),
        g3=jnp.ones((out_planes,), jnp.float32),
        b3=0.1 * jax.random.normal(ks[7], (out_planes,), jnp.float32),
    )

    out = decoder_forward(x, params, kernel_size, stride, padding,
                          output_padding)
    out = jax.block_until_ready(out)

    ho = (h - 1) * stride - 2 * padding + kernel_size + output_padding
    assert out.shape == (n, out_planes, ho, ho), out.shape
    assert bool(jnp.all(jnp.isfinite(out)))

    ref = decoder_reference(x, params, kernel_size, stride, padding,
                            output_padding)
    err = float(jnp.max(jnp.abs(out - ref)))
    assert err < 5e-2, f"mismatch vs reference: {err}"

    print("KERNEL_OK")
</pallas_src>

<mosaic_0001>
module attributes {stable_mosaic.version = 11 : i64} {
  func.func @_decoder_kernel(%arg0: i32, %arg1: memref<32x128xf32, #tpu.memory_space<vmem>>, %arg2: memref<8x32xf32, #tpu.memory_space<vmem>>, %arg3: memref<9x8x8xf32, #tpu.memory_space<vmem>>, %arg4: memref<16x8xf32, #tpu.memory_space<vmem>>, %arg5: memref<4x128xf32, #tpu.memory_space<vmem>>, %arg6: memref<8x1xf32, #tpu.memory_space<vmem>>, %arg7: memref<8x1xf32, #tpu.memory_space<vmem>>, %arg8: memref<8x1xf32, #tpu.memory_space<vmem>>, %arg9: memref<8x1xf32, #tpu.memory_space<vmem>>, %arg10: memref<16x1xf32, #tpu.memory_space<vmem>>, %arg11: memref<16x1xf32, #tpu.memory_space<vmem>>, %arg12: memref<16x512xf32, #tpu.memory_space<vmem>>, %arg13: memref<8x256xf32, #tpu.memory_space<vmem>>) attributes {dimension_semantics = [#tpu.dimension_semantics<arbitrary>], iteration_bounds = array<i64: 1>, scalar_prefetch = 0 : i64, scratch_operands = 1 : i64, tpu.core_type = #tpu.core_type<tc>, window_params = [{pipeline_mode = #tpu.pipeline_mode<synchronous>, transform_indices = @transform_0, window_bounds = array<i64: 32, 128>}, {pipeline_mode = #tpu.pipeline_mode<synchronous>, transform_indices = @transform_1, window_bounds = array<i64: 8, 32>}, {pipeline_mode = #tpu.pipeline_mode<synchronous>, transform_indices = @transform_2, window_bounds = array<i64: 9, 8, 8>}, {pipeline_mode = #tpu.pipeline_mode<synchronous>, transform_indices = @transform_3, window_bounds = array<i64: 16, 8>}, {pipeline_mode = #tpu.pipeline_mode<synchronous>, transform_indices = @transform_4, window_bounds = array<i64: 4, 128>}, {pipeline_mode = #tpu.pipeline_mode<synchronous>, transform_indices = @transform_5, window_bounds = array<i64: 8, 1>}, {pipeline_mode = #tpu.pipeline_mode<synchronous>, transform_indices = @transform_6, window_bounds = array<i64: 8, 1>}, {pipeline_mode = #tpu.pipeline_mode<synchronous>, transform_indices = @transform_7, window_bounds = array<i64: 8, 1>}, {pipeline_mode = #tpu.pipeline_mode<synchronous>, transform_indices = @transform_8, window_bounds = array<i64: 8, 1>}, {pipeline_mode = #tpu.pipeline_mode<synchronous>, transform_indices = @transform_9, window_bounds = array<i64: 16, 1>}, {pipeline_mode = #tpu.pipeline_mode<synchronous>, transform_indices = @transform_10, window_bounds = array<i64: 16, 1>}, {pipeline_mode = #tpu.pipeline_mode<synchronous>, transform_indices = @transform_11, window_bounds = array<i64: 16, 512>}]} {
    %c0 = arith.constant 0 : index
    %c0_0 = arith.constant 0 : index
    %0 = vector.load %arg2[%c0, %c0_0] : memref<8x32xf32, #tpu.memory_space<vmem>>, vector<8x32xf32>
    %c0_1 = arith.constant 0 : index
    %c0_2 = arith.constant 0 : index
    %1 = vector.load %arg1[%c0_1, %c0_2] : memref<32x128xf32, #tpu.memory_space<vmem>>, vector<32x128xf32>
    %cst = arith.constant dense<0.000000e+00> : vector<8x128xf32>
    %2 = tpu.matmul %0, %1, %cst {dimension_numbers = #tpu.dot_dimension_numbers<[1], [0], [0], [1], [0, 0, 1, 1], [], []>} : vector<8x32xf32>, vector<32x128xf32>, vector<8x128xf32> -> vector<8x128xf32>
    %c0_3 = arith.constant 0 : index
    %c0_4 = arith.constant 0 : index
    %3 = vector.load %arg6[%c0_3, %c0_4] : memref<8x1xf32, #tpu.memory_space<vmem>>, vector<8x1xf32>
    %c0_5 = arith.constant 0 : index
    %c0_6 = arith.constant 0 : index
    %4 = vector.load %arg7[%c0_5, %c0_6] : memref<8x1xf32, #tpu.memory_space<vmem>>, vector<8x1xf32>
    %cst_7 = arith.constant dense<0.000000e+00> : vector<8xf32>
    %5 = vector.multi_reduction <add>, %2, %cst_7 [1] : vector<8x128xf32> to vector<8xf32>
    %6 = vector.shape_cast %5 : vector<8xf32> to vector<8x1xf32>
    %cst_8 = arith.constant 0.000000e+00 : f32
    %7 = vector.broadcast %cst_8 : f32 to vector<8x1xf32>
    %8 = arith.addf %7, %6 : vector<8x1xf32>
    %cst_9 = arith.constant 7.812500e-03 : f32
    %9 = vector.broadcast %cst_9 : f32 to vector<8x1xf32>
    %10 = arith.mulf %8, %9 : vector<8x1xf32>
    %11 = vector.broadcast %10 : vector<8x1xf32> to vector<8x128xf32>
    %12 = arith.subf %2, %11 : vector<8x128xf32>
    %13 = arith.mulf %12, %12 : vector<8x128xf32>
    %cst_10 = arith.constant dense<0.000000e+00> : vector<8xf32>
    %14 = vector.multi_reduction <add>, %13, %cst_10 [1] : vector<8x128xf32> to vector<8xf32>
    %15 = vector.shape_cast %14 : vector<8xf32> to vector<8x1xf32>
    %cst_11 = arith.constant 0.000000e+00 : f32
    %16 = vector.broadcast %cst_11 : f32 to vector<8x1xf32>
    %17 = arith.addf %16, %15 : vector<8x1xf32>
    %cst_12 = arith.constant 7.812500e-03 : f32
    %18 = vector.broadcast %cst_12 : f32 to vector<8x1xf32>
    %19 = arith.mulf %17, %18 : vector<8x1xf32>
    %cst_13 = arith.constant 9.99999974E-6 : f32
    %20 = vector.broadcast %cst_13 : f32 to vector<8x1xf32>
    %21 = arith.addf %19, %20 : vector<8x1xf32>
    %22 = math.rsqrt %21 : vector<8x1xf32>
    %23 = arith.mulf %3, %22 : vector<8x1xf32>
    %24 = arith.mulf %10, %23 : vector<8x1xf32>
    %25 = arith.subf %4, %24 : vector<8x1xf32>
    %26 = vector.broadcast %23 : vector<8x1xf32> to vector<8x128xf32>
    %27 = arith.mulf %2, %26 : vector<8x128xf32>
    %28 = vector.broadcast %25 : vector<8x1xf32> to vector<8x128xf32>
    %29 = arith.addf %27, %28 : vector<8x128xf32>
    %cst_14 = arith.constant 0.000000e+00 : f32
    %30 = vector.broadcast %cst_14 : f32 to vector<8x128xf32>
    %31 = arith.maximumf %29, %30 : vector<8x128xf32>
    %cst_15 = arith.constant 0.000000e+00 : f32
    %32 = vector.broadcast %cst_15 : f32 to vector<8x256xf32>
    %c0_16 = arith.constant 0 : index
    %c0_17 = arith.constant 0 : index
    %33 = vector.load %arg13[%c0_16, %c0_17] : memref<8x256xf32, #tpu.memory_space<vmem>>, vector<8x256xf32>
    tpu.vector_store %arg13[%c0_16, %c0_17], %32 {strides = array<i32>} : memref<8x256xf32, #tpu.memory_space<vmem>>, vector<8x256xf32>,
    %c0_18 = arith.constant 0 : index
    %c0_19 = arith.constant 0 : index
    %34 = vector.load %arg13[%c0_18, %c0_19] : memref<8x256xf32, #tpu.memory_space<vmem>>, vector<8x128xf32>
    tpu.vector_store %arg13[%c0_18, %c0_19], %31 {strides = array<i32>} : memref<8x256xf32, #tpu.memory_space<vmem>>, vector<8x128xf32>,
    %cst_20 = arith.constant 0.000000e+00 : f32
    %35 = vector.broadcast %cst_20 : f32 to vector<8x128xf32>
    %c0_21 = arith.constant 0 : index
    %c0_22 = arith.constant 0 : index
    %36 = vector.load %arg13[%c0_21, %c0_22] : memref<8x256xf32, #tpu.memory_space<vmem>>, vector<8x128xf32>
    %c4 = arith.constant 4 : index
    %c0_23 = arith.constant 0 : index
    %c0_24 = arith.constant 0 : index
    %37 = vector.load %arg3[%c4, %c0_23, %c0_24] : memref<9x8x8xf32, #tpu.memory_space<vmem>>, vector<1x8x8xf32>
    %38 = vector.shape_cast %37 : vector<1x8x8xf32> to vector<8x8xf32>
    %cst_25 = arith.constant dense<0.000000e+00> : vector<8x128xf32>
    %39 = tpu.matmul %38, %36, %cst_25 {dimension_numbers = #tpu.dot_dimension_numbers<[1], [0], [0], [1], [0, 0, 1, 1], [], []>} : vector<8x8xf32>, vector<8x128xf32>, vector<8x128xf32> -> vector<8x128xf32>
    %40 = arith.addf %35, %39 : vector<8x128xf32>
    %cst_26 = arith.constant 0.000000e+00 : f32
    %41 = vector.broadcast %cst_26 : f32 to vector<8x128xf32>
    %c0_27 = arith.constant 0 : index
    %c1 = arith.constant 1 : index
    %42 = vector.load %arg13[%c0_27, %c1] : memref<8x256xf32, #tpu.memory_space<vmem>>, vector<8x128xf32>
    %c1_28 = arith.constant 1 : index
    %c0_29 = arith.constant 0 : index
    %43 = vector.load %arg5[%c1_28, %c0_29] : memref<4x128xf32, #tpu.memory_space<vmem>>, vector<1x128xf32>
    %44 = vector.broadcast %43 : vector<1x128xf32> to vector<8x128xf32>
    %45 = arith.mulf %42, %44 : vector<8x128xf32>
    %c3 = arith.constant 3 : index
    %c0_30 = arith.constant 0 : index
    %c0_31 = arith.constant 0 : index
    %46 = vector.load %arg3[%c3, %c0_30, %c0_31] : memref<9x8x8xf32, #tpu.memory_space<vmem>>, vector<1x8x8xf32>
    %47 = vector.shape_cast %46 : vector<1x8x8xf32> to vector<8x8xf32>
    %cst_32 = arith.constant dense<0.000000e+00> : vector<8x128xf32>
    %48 = tpu.matmul %47, %45, %cst_32 {dimension_numbers = #tpu.dot_dimension_numbers<[1], [0], [0], [1], [0, 0, 1, 1], [], []>} : vector<8x8xf32>, vector<8x128xf32>, vector<8x128xf32> -> vector<8x128xf32>
    %49 = arith.addf %41, %48 : vector<8x128xf32>
    %c0_33 = arith.constant 0 : index
    %c0_34 = arith.constant 0 : index
    %50 = vector.load %arg13[%c0_33, %c0_34] : memref<8x256xf32, #tpu.memory_space<vmem>>, vector<8x128xf32>
    %c5 = arith.constant 5 : index
    %c0_35 = arith.constant 0 : index
    %c0_36 = arith.constant 0 : index
    %51 = vector.load %arg3[%c5, %c0_35, %c0_36] : memref<9x8x8xf32, #tpu.memory_space<vmem>>, vector<1x8x8xf32>
    %52 = vector.shape_cast %51 : vector<1x8x8xf32> to vector<8x8xf32>
    %cst_37 = arith.constant dense<0.000000e+00> : vector<8x128xf32>
    %53 = tpu.matmul %52, %50, %cst_37 {dimension_numbers = #tpu.dot_dimension_numbers<[1], [0], [0], [1], [0, 0, 1, 1], [], []>} : vector<8x8xf32>, vector<8x128xf32>, vector<8x128xf32> -> vector<8x128xf32>
    %54 = arith.addf %49, %53 : vector<8x128xf32>
    %cst_38 = arith.constant 0.000000e+00 : f32
    %55 = vector.broadcast %cst_38 : f32 to vector<8x128xf32>
    %c0_39 = arith.constant 0 : index
    %c8 = arith.constant 8 : index
    %56 = vector.load %arg13[%c0_39, %c8] : memref<8x256xf32, #tpu.memory_space<vmem>>, vector<8x128xf32>
    %c2 = arith.constant 2 : index
    %c0_40 = arith.constant 0 : index
    %57 = vector.load %arg5[%c2, %c0_40] : memref<4x128xf32, #tpu.memory_space<vmem>>, vector<1x128xf32>
    %58 = vector.broadcast %57 : vector<1x128xf32> to vector<8x128xf32>
    %59 = arith.mulf %56, %58 : vector<8x128xf32>
    %c1_41 = arith.constant 1 : index
    %c0_42 = arith.constant 0 : index
    %c0_43 = arith.constant 0 : index
    %60 = vector.load %arg3[%c1_41, %c0_42, %c0_43] : memref<9x8x8xf32, #tpu.memory_space<vmem>>, vector<1x8x8xf32>
    %61 = vector.shape_cast %60 : vector<1x8x8xf32> to vector<8x8xf32>
    %cst_44 = arith.constant dense<0.000000e+00> : vector<8x128xf32>
    %62 = tpu.matmul %61, %59, %cst_44 {dimension_numbers = #tpu.dot_dimension_numbers<[1], [0], [0], [1], [0, 0, 1, 1], [], []>} : vector<8x8xf32>, vector<8x128xf32>, vector<8x128xf32> -> vector<8x128xf32>
    %63 = arith.addf %55, %62 : vector<8x128xf32>
    %c0_45 = arith.constant 0 : index
    %c0_46 = arith.constant 0 : index
    %64 = vector.load %arg13[%c0_45, %c0_46] : memref<8x256xf32, #tpu.memory_space<vmem>>, vector<8x128xf32>
    %c7 = arith.constant 7 : index
    %c0_47 = arith.constant 0 : index
    %c0_48 = arith.constant 0 : index
    %65 = vector.load %arg3[%c7, %c0_47, %c0_48] : memref<9x8x8xf32, #tpu.memory_space<vmem>>, vector<1x8x8xf32>
    %66 = vector.shape_cast %65 : vector<1x8x8xf32> to vector<8x8xf32>
    %cst_49 = arith.constant dense<0.000000e+00> : vector<8x128xf32>
    %67 = tpu.matmul %66, %64, %cst_49 {dimension_numbers = #tpu.dot_dimension_numbers<[1], [0], [0], [1], [0, 0, 1, 1], [], []>} : vector<8x8xf32>, vector<8x128xf32>, vector<8x128xf32> -> vector<8x128xf32>
    %68 = arith.addf %63, %67 : vector<8x128xf32>
    %cst_50 = arith.constant 0.000000e+00 : f32
    %69 = vector.broadcast %cst_50 : f32 to vector<8x128xf32>
    %c0_51 = arith.constant 0 : index
    %c9 = arith.constant 9 : index
    %70 = vector.load %arg13[%c0_51, %c9] : memref<8x256xf32, #tpu.memory_space<vmem>>, vector<8x128xf32>
    %c3_52 = arith.constant 3 : index
    %c0_53 = arith.constant 0 : index
    %71 = vector.load %arg5[%c3_52, %c0_53] : memref<4x128xf32, #tpu.memory_space<vmem>>, vector<1x128xf32>
    %72 = vector.broadcast %71 : vector<1x128xf32> to vector<8x128xf32>
    %73 = arith.mulf %70, %72 : vector<8x128xf32>
    %c0_54 = arith.constant 0 : index
    %c0_55 = arith.constant 0 : index
    %c0_56 = arith.constant 0 : index
    %74 = vector.load %arg3[%c0_54, %c0_55, %c0_56] : memref<9x8x8xf32, #tpu.memory_space<vmem>>, vector<1x8x8xf32>
    %75 = vector.shape_cast %74 : vector<1x8x8xf32> to vector<8x8xf32>
    %cst_57 = arith.constant dense<0.000000e+00> : vector<8x128xf32>
    %76 = tpu.matmul %75, %73, %cst_57 {dimension_numbers = #tpu.dot_dimension_numbers<[1], [0], [0], [1], [0, 0, 1, 1], [], []>} : vector<8x8xf32>, vector<8x128xf32>, vector<8x128xf32> -> vector<8x128xf32>
    %77 = arith.addf %69, %76 : vector<8x128xf32>
    %c0_58 = arith.constant 0 : index
    %c8_59 = arith.constant 8 : index
    %78 = vector.load %arg13[%c0_58, %c8_59] : memref<8x256xf32, #tpu.memory_space<vmem>>, vector<8x128xf32>
    %c2_60 = arith.constant 2 : index
    %c0_61 = arith.constant 0 : index
    %79 = vector.load %arg5[%c2_60, %c0_61] : memref<4x128xf32, #tpu.memory_space<vmem>>, vector<1x128xf32>
    %80 = vector.broadcast %79 : vector<1x128xf32> to vector<8x128xf32>
    %81 = arith.mulf %78, %80 : vector<8x128xf32>
    %c2_62 = arith.constant 2 : index
    %c0_63 = arith.constant 0 : index
    %c0_64 = arith.constant 0 : index
    %82 = vector.load %arg3[%c2_62, %c0_63, %c0_64] : memref<9x8x8xf32, #tpu.memory_space<vmem>>, vector<1x8x8xf32>
    %83 = vector.shape_cast %82 : vector<1x8x8xf32> to vector<8x8xf32>
    %cst_65 = arith.constant dense<0.000000e+00> : vector<8x128xf32>
    %84 = tpu.matmul %83, %81, %cst_65 {dimension_numbers = #tpu.dot_dimension_numbers<[1], [0], [0], [1], [0, 0, 1, 1], [], []>} : vector<8x8xf32>, vector<8x128xf32>, vector<8x128xf32> -> vector<8x128xf32>
    %85 = arith.addf %77, %84 : vector<8x128xf32>
    %c0_66 = arith.constant 0 : index
    %c1_67 = arith.constant 1 : index
    %86 = vector.load %arg13[%c0_66, %c1_67] : memref<8x256xf32, #tpu.memory_space<vmem>>, vector<8x128xf32>
    %c1_68 = arith.constant 1 : index
    %c0_69 = arith.constant 0 : index
    %87 = vector.load %arg5[%c1_68, %c0_69] : memref<4x128xf32, #tpu.memory_space<vmem>>, vector<1x128xf32>
    %88 = vector.broadcast %87 : vector<1x128xf32> to vector<8x128xf32>
    %89 = arith.mulf %86, %88 : vector<8x128xf32>
    %c6 = arith.constant 6 : index
    %c0_70 = arith.constant 0 : index
    %c0_71 = arith.constant 0 : index
    %90 = vector.load %arg3[%c6, %c0_70, %c0_71] : memref<9x8x8xf32, #tpu.memory_space<vmem>>, vector<1x8x8xf32>
    %91 = vector.shape_cast %90 : vector<1x8x8xf32> to vector<8x8xf32>
    %cst_72 = arith.constant dense<0.000000e+00> : vector<8x128xf32>
    %92 = tpu.matmul %91, %89, %cst_72 {dimension_numbers = #tpu.dot_dimension_numbers<[1], [0], [0], [1], [0, 0, 1, 1], [], []>} : vector<8x8xf32>, vector<8x128xf32>, vector<8x128xf32> -> vector<8x128xf32>
    %93 = arith.addf %85, %92 : vector<8x128xf32>
    %c0_73 = arith.constant 0 : index
    %c0_74 = arith.constant 0 : index
    %94 = vector.load %arg13[%c0_73, %c0_74] : memref<8x256xf32, #tpu.memory_space<vmem>>, vector<8x128xf32>
    %c8_75 = arith.constant 8 : index
    %c0_76 = arith.constant 0 : index
    %c0_77 = arith.constant 0 : index
    %95 = vector.load %arg3[%c8_75, %c0_76, %c0_77] : memref<9x8x8xf32, #tpu.memory_space<vmem>>, vector<1x8x8xf32>
    %96 = vector.shape_cast %95 : vector<1x8x8xf32> to vector<8x8xf32>
    %cst_78 = arith.constant dense<0.000000e+00> : vector<8x128xf32>
    %97 = tpu.matmul %96, %94, %cst_78 {dimension_numbers = #tpu.dot_dimension_numbers<[1], [0], [0], [1], [0, 0, 1, 1], [], []>} : vector<8x8xf32>, vector<8x128xf32>, vector<8x128xf32> -> vector<8x128xf32>
    %98 = arith.addf %93, %97 : vector<8x128xf32>
    %c0_79 = arith.constant 0 : index
    %c0_80 = arith.constant 0 : index
    %99 = vector.load %arg8[%c0_79, %c0_80] : memref<8x1xf32, #tpu.memory_space<vmem>>, vector<8x1xf32>
    %c0_81 = arith.constant 0 : index
    %c0_82 = arith.constant 0 : index
    %100 = vector.load %arg9[%c0_81, %c0_82] : memref<8x1xf32, #tpu.memory_space<vmem>>, vector<8x1xf32>
    %cst_83 = arith.constant dense<0.000000e+00> : vector<8xf32>
    %101 = vector.multi_reduction <add>, %40, %cst_83 [1] : vector<8x128xf32> to vector<8xf32>
    %102 = vector.shape_cast %101 : vector<8xf32> to vector<8x1xf32>
    %cst_84 = arith.constant 0.000000e+00 : f32
    %103 = vector.broadcast %cst_84 : f32 to vector<8x1xf32>
    %104 = arith.addf %103, %102 : vector<8x1xf32>
    %cst_85 = arith.constant dense<0.000000e+00> : vector<8xf32>
    %105 = vector.multi_reduction <add>, %54, %cst_85 [1] : vector<8x128xf32> to vector<8xf32>
    %106 = vector.shape_cast %105 : vector<8xf32> to vector<8x1xf32>
    %107 = arith.addf %104, %106 : vector<8x1xf32>
    %cst_86 = arith.constant dense<0.000000e+00> : vector<8xf32>
    %108 = vector.multi_reduction <add>, %68, %cst_86 [1] : vector<8x128xf32> to vector<8xf32>
    %109 = vector.shape_cast %108 : vector<8xf32> to vector<8x1xf32>
    %110 = arith.addf %107, %109 : vector<8x1xf32>
    %cst_87 = arith.constant dense<0.000000e+00> : vector<8xf32>
    %111 = vector.multi_reduction <add>, %98, %cst_87 [1] : vector<8x128xf32> to vector<8xf32>
    %112 = vector.shape_cast %111 : vector<8xf32> to vector<8x1xf32>
    %113 = arith.addf %110, %112 : vector<8x1xf32>
    %cst_88 = arith.constant 0.001953125 : f32
    %114 = vector.broadcast %cst_88 : f32 to vector<8x1xf32>
    %115 = arith.mulf %113, %114 : vector<8x1xf32>
    %116 = vector.broadcast %115 : vector<8x1xf32> to vector<8x128xf32>
    %117 = arith.subf %40, %116 : vector<8x128xf32>
    %118 = arith.mulf %117, %117 : vector<8x128xf32>
    %cst_89 = arith.constant dense<0.000000e+00> : vector<8xf32>
    %119 = vector.multi_reduction <add>, %118, %cst_89 [1] : vector<8x128xf32> to vector<8xf32>
    %120 = vector.shape_cast %119 : vector<8xf32> to vector<8x1xf32>
    %cst_90 = arith.constant 0.000000e+00 : f32
    %121 = vector.broadcast %cst_90 : f32 to vector<8x1xf32>
    %122 = arith.addf %121, %120 : vector<8x1xf32>
    %123 = vector.broadcast %115 : vector<8x1xf32> to vector<8x128xf32>
    %124 = arith.subf %54, %123 : vector<8x128xf32>
    %125 = arith.mulf %124, %124 : vector<8x128xf32>
    %cst_91 = arith.constant dense<0.000000e+00> : vector<8xf32>
    %126 = vector.multi_reduction <add>, %125, %cst_91 [1] : vector<8x128xf32> to vector<8xf32>
    %127 = vector.shape_cast %126 : vector<8xf32> to vector<8x1xf32>
    %128 = arith.addf %122, %127 : vector<8x1xf32>
    %129 = vector.broadcast %115 : vector<8x1xf32> to vector<8x128xf32>
    %130 = arith.subf %68, %129 : vector<8x128xf32>
    %131 = arith.mulf %130, %130 : vector<8x128xf32>
    %cst_92 = arith.constant dense<0.000000e+00> : vector<8xf32>
    %132 = vector.multi_reduction <add>, %131, %cst_92 [1] : vector<8x128xf32> to vector<8xf32>
    %133 = vector.shape_cast %132 : vector<8xf32> to vector<8x1xf32>
    %134 = arith.addf %128, %133 : vector<8x1xf32>
    %135 = vector.broadcast %115 : vector<8x1xf32> to vector<8x128xf32>
    %136 = arith.subf %98, %135 : vector<8x128xf32>
    %137 = arith.mulf %136, %136 : vector<8x128xf32>
    %cst_93 = arith.constant dense<0.000000e+00> : vector<8xf32>
    %138 = vector.multi_reduction <add>, %137, %cst_93 [1] : vector<8x128xf32> to vector<8xf32>
    %139 = vector.shape_cast %138 : vector<8xf32> to vector<8x1xf32>
    %140 = arith.addf %134, %139 : vector<8x1xf32>
    %cst_94 = arith.constant 0.001953125 : f32
    %141 = vector.broadcast %cst_94 : f32 to vector<8x1xf32>
    %142 = arith.mulf %140, %141 : vector<8x1xf32>
    %cst_95 = arith.constant 9.99999974E-6 : f32
    %143 = vector.broadcast %cst_95 : f32 to vector<8x1xf32>
    %144 = arith.addf %142, %143 : vector<8x1xf32>
    %145 = math.rsqrt %144 : vector<8x1xf32>
    %146 = arith.mulf %99, %145 : vector<8x1xf32>
    %147 = arith.mulf %115, %146 : vector<8x1xf32>
    %148 = arith.subf %100, %147 : vector<8x1xf32>
    %149 = vector.broadcast %146 : vector<8x1xf32> to vector<8x128xf32>
    %150 = arith.mulf %40, %149 : vector<8x128xf32>
    %151 = vector.broadcast %148 : vector<8x1xf32> to vector<8x128xf32>
    %152 = arith.addf %150, %151 : vector<8x128xf32>
    %cst_96 = arith.constant 0.000000e+00 : f32
    %153 = vector.broadcast %cst_96 : f32 to vector<8x128xf32>
    %154 = arith.maximumf %152, %153 : vector<8x128xf32>
    %155 = vector.broadcast %146 : vector<8x1xf32> to vector<8x128xf32>
    %156 = arith.mulf %54, %155 : vector<8x128xf32>
    %157 = vector.broadcast %148 : vector<8x1xf32> to vector<8x128xf32>
    %158 = arith.addf %156, %157 : vector<8x128xf32>
    %cst_97 = arith.constant 0.000000e+00 : f32
    %159 = vector.broadcast %cst_97 : f32 to vector<8x128xf32>
    %160 = arith.maximumf %158, %159 : vector<8x128xf32>
    %161 = vector.broadcast %146 : vector<8x1xf32> to vector<8x128xf32>
    %162 = arith.mulf %68, %161 : vector<8x128xf32>
    %163 = vector.broadcast %148 : vector<8x1xf32> to vector<8x128xf32>
    %164 = arith.addf %162, %163 : vector<8x128xf32>
    %cst_98 = arith.constant 0.000000e+00 : f32
    %165 = vector.broadcast %cst_98 : f32 to vector<8x128xf32>
    %166 = arith.maximumf %164, %165 : vector<8x128xf32>
    %167 = vector.broadcast %146 : vector<8x1xf32> to vector<8x128xf32>
    %168 = arith.mulf %98, %167 : vector<8x128xf32>
    %169 = vector.broadcast %148 : vector<8x1xf32> to vector<8x128xf32>
    %170 = arith.addf %168, %169 : vector<8x128xf32>
    %cst_99 = arith.constant 0.000000e+00 : f32
    %171 = vector.broadcast %cst_99 : f32 to vector<8x128xf32>
    %172 = arith.maximumf %170, %171 : vector<8x128xf32>
    %c0_100 = arith.constant 0 : index
    %c0_101 = arith.constant 0 : index
    %173 = vector.load %arg4[%c0_100, %c0_101] : memref<16x8xf32, #tpu.memory_space<vmem>>, vector<16x8xf32>
    %cst_102 = arith.constant dense<0.000000e+00> : vector<16x128xf32>
    %174 = tpu.matmul %173, %154, %cst_102 {dimension_numbers = #tpu.dot_dimension_numbers<[1], [0], [0], [1], [0, 0, 1, 1], [], []>} : vector<16x8xf32>, vector<8x128xf32>, vector<16x128xf32> -> vector<16x128xf32>
    %c0_103 = arith.constant 0 : index
    %c0_104 = arith.constant 0 : index
    %175 = vector.load %arg4[%c0_103, %c0_104] : memref<16x8xf32, #tpu.memory_space<vmem>>, vector<16x8xf32>
    %cst_105 = arith.constant dense<0.000000e+00> : vector<16x128xf32>
    %176 = tpu.matmul %175, %160, %cst_105 {dimension_numbers = #tpu.dot_dimension_numbers<[1], [0], [0], [1], [0, 0, 1, 1], [], []>} : vector<16x8xf32>, vector<8x128xf32>, vector<16x128xf32> -> vector<16x128xf32>
    %c0_106 = arith.constant 0 : index
    %c0_107 = arith.constant 0 : index
    %177 = vector.load %arg4[%c0_106, %c0_107] : memref<16x8xf32, #tpu.memory_space<vmem>>, vector<16x8xf32>
    %cst_108 = arith.constant dense<0.000000e+00> : vector<16x128xf32>
    %178 = tpu.matmul %177, %166, %cst_108 {dimension_numbers = #tpu.dot_dimension_numbers<[1], [0], [0], [1], [0, 0, 1, 1], [], []>} : vector<16x8xf32>, vector<8x128xf32>, vector<16x128xf32> -> vector<16x128xf32>
    %c0_109 = arith.constant 0 : index
    %c0_110 = arith.constant 0 : index
    %179 = vector.load %arg4[%c0_109, %c0_110] : memref<16x8xf32, #tpu.memory_space<vmem>>, vector<16x8xf32>
    %cst_111 = arith.constant dense<0.000000e+00> : vector<16x128xf32>
    %180 = tpu.matmul %179, %172, %cst_111 {dimension_numbers = #tpu.dot_dimension_numbers<[1], [0], [0], [1], [0, 0, 1, 1], [], []>} : vector<16x8xf32>, vector<8x128xf32>, vector<16x128xf32> -> vector<16x128xf32>
    %c0_112 = arith.constant 0 : index
    %c0_113 = arith.constant 0 : index
    %181 = vector.load %arg10[%c0_112, %c0_113] : memref<16x1xf32, #tpu.memory_space<vmem>>, vector<16x1xf32>
    %c0_114 = arith.constant 0 : index
    %c0_115 = arith.constant 0 : index
    %182 = vector.load %arg11[%c0_114, %c0_115] : memref<16x1xf32, #tpu.memory_space<vmem>>, vector<16x1xf32>
    %cst_116 = arith.constant dense<0.000000e+00> : vector<16xf32>
    %183 = vector.multi_reduction <add>, %174, %cst_116 [1] : vector<16x128xf32> to vector<16xf32>
    %184 = vector.shape_cast %183 : vector<16xf32> to vector<16x1xf32>
    %cst_117 = arith.constant 0.000000e+00 : f32
    %185 = vector.broadcast %cst_117 : f32 to vector<16x1xf32>
    %186 = arith.addf %185, %184 : vector<16x1xf32>
    %cst_118 = arith.constant dense<0.000000e+00> : vector<16xf32>
    %187 = vector.multi_reduction <add>, %176, %cst_118 [1] : vector<16x128xf32> to vector<16xf32>
    %188 = vector.shape_cast %187 : vector<16xf32> to vector<16x1xf32>
    %189 = arith.addf %186, %188 : vector<16x1xf32>
    %cst_119 = arith.constant dense<0.000000e+00> : vector<16xf32>
    %190 = vector.multi_reduction <add>, %178, %cst_119 [1] : vector<16x128xf32> to vector<16xf32>
    %191 = vector.shape_cast %190 : vector<16xf32> to vector<16x1xf32>
    %192 = arith.addf %189, %191 : vector<16x1xf32>
    %cst_120 = arith.constant dense<0.000000e+00> : vector<16xf32>
    %193 = vector.multi_reduction <add>, %180, %cst_120 [1] : vector<16x128xf32> to vector<16xf32>
    %194 = vector.shape_cast %193 : vector<16xf32> to vector<16x1xf32>
    %195 = arith.addf %192, %194 : vector<16x1xf32>
    %cst_121 = arith.constant 0.001953125 : f32
    %196 = vector.broadcast %cst_121 : f32 to vector<16x1xf32>
    %197 = arith.mulf %195, %196 : vector<16x1xf32>
    %198 = vector.broadcast %197 : vector<16x1xf32> to vector<16x128xf32>
    %199 = arith.subf %174, %198 : vector<16x128xf32>
    %200 = arith.mulf %199, %199 : vector<16x128xf32>
    %cst_122 = arith.constant dense<0.000000e+00> : vector<16xf32>
    %201 = vector.multi_reduction <add>, %200, %cst_122 [1] : vector<16x128xf32> to vector<16xf32>
    %202 = vector.shape_cast %201 : vector<16xf32> to vector<16x1xf32>
    %cst_123 = arith.constant 0.000000e+00 : f32
    %203 = vector.broadcast %cst_123 : f32 to vector<16x1xf32>
    %204 = arith.addf %203, %202 : vector<16x1xf32>
    %205 = vector.broadcast %197 : vector<16x1xf32> to vector<16x128xf32>
    %206 = arith.subf %176, %205 : vector<16x128xf32>
    %207 = arith.mulf %206, %206 : vector<16x128xf32>
    %cst_124 = arith.constant dense<0.000000e+00> : vector<16xf32>
    %208 = vector.multi_reduction <add>, %207, %cst_124 [1] : vector<16x128xf32> to vector<16xf32>
    %209 = vector.shape_cast %208 : vector<16xf32> to vector<16x1xf32>
    %210 = arith.addf %204, %209 : vector<16x1xf32>
    %211 = vector.broadcast %197 : vector<16x1xf32> to vector<16x128xf32>
    %212 = arith.subf %178, %211 : vector<16x128xf32>
    %213 = arith.mulf %212, %212 : vector<16x128xf32>
    %cst_125 = arith.constant dense<0.000000e+00> : vector<16xf32>
    %214 = vector.multi_reduction <add>, %213, %cst_125 [1] : vector<16x128xf32> to vector<16xf32>
    %215 = vector.shape_cast %214 : vector<16xf32> to vector<16x1xf32>
    %216 = arith.addf %210, %215 : vector<16x1xf32>
    %217 = vector.broadcast %197 : vector<16x1xf32> to vector<16x128xf32>
    %218 = arith.subf %180, %217 : vector<16x128xf32>
    %219 = arith.mulf %218, %218 : vector<16x128xf32>
    %cst_126 = arith.constant dense<0.000000e+00> : vector<16xf32>
    %220 = vector.multi_reduction <add>, %219, %cst_126 [1] : vector<16x128xf32> to vector<16xf32>
    %221 = vector.shape_cast %220 : vector<16xf32> to vector<16x1xf32>
    %222 = arith.addf %216, %221 : vector<16x1xf32>
    %cst_127 = arith.constant 0.001953125 : f32
    %223 = vector.broadcast %cst_127 : f32 to vector<16x1xf32>
    %224 = arith.mulf %222, %223 : vector<16x1xf32>
    %cst_128 = arith.constant 9.99999974E-6 : f32
    %225 = vector.broadcast %cst_128 : f32 to vector<16x1xf32>
    %226 = arith.addf %224, %225 : vector<16x1xf32>
    %227 = math.rsqrt %226 : vector<16x1xf32>
    %228 = arith.mulf %181, %227 : vector<16x1xf32>
    %229 = arith.mulf %197, %228 : vector<16x1xf32>
    %230 = arith.subf %182, %229 : vector<16x1xf32>
    %231 = vector.broadcast %228 : vector<16x1xf32> to vector<16x128xf32>
    %232 = arith.mulf %174, %231 : vector<16x128xf32>
    %233 = vector.broadcast %230 : vector<16x1xf32> to vector<16x128xf32>
    %234 = arith.addf %232, %233 : vector<16x128xf32>
    %cst_129 = arith.constant 0.000000e+00 : f32
    %235 = vector.broadcast %cst_129 : f32 to vector<16x128xf32>
    %236 = arith.maximumf %234, %235 : vector<16x128xf32>
    %237 = vector.broadcast %228 : vector<16x1xf32> to vector<16x128xf32>
    %238 = arith.mulf %176, %237 : vector<16x128xf32>
    %239 = vector.broadcast %230 : vector<16x1xf32> to vector<16x128xf32>
    %240 = arith.addf %238, %239 : vector<16x128xf32>
    %cst_130 = arith.constant 0.000000e+00 : f32
    %241 = vector.broadcast %cst_130 : f32 to vector<16x128xf32>
    %242 = arith.maximumf %240, %241 : vector<16x128xf32>
    %243 = vector.broadcast %228 : vector<16x1xf32> to vector<16x128xf32>
    %244 = arith.mulf %178, %243 : vector<16x128xf32>
    %245 = vector.broadcast %230 : vector<16x1xf32> to vector<16x128xf32>
    %246 = arith.addf %244, %245 : vector<16x128xf32>
    %cst_131 = arith.constant 0.000000e+00 : f32
    %247 = vector.broadcast %cst_131 : f32 to vector<16x128xf32>
    %248 = arith.maximumf %246, %247 : vector<16x128xf32>
    %249 = vector.broadcast %228 : vector<16x1xf32> to vector<16x128xf32>
    %250 = arith.mulf %180, %249 : vector<16x128xf32>
    %251 = vector.broadcast %230 : vector<16x1xf32> to vector<16x128xf32>
    %252 = arith.addf %250, %251 : vector<16x128xf32>
    %cst_132 = arith.constant 0.000000e+00 : f32
    %253 = vector.broadcast %cst_132 : f32 to vector<16x128xf32>
    %254 = arith.maximumf %252, %253 : vector<16x128xf32>
    %c0_133 = arith.constant 0 : index
    %c0_134 = arith.constant 0 : index
    %255 = vector.load %arg12[%c0_133, %c0_134] : memref<16x512xf32, #tpu.memory_space<vmem>>, vector<16x128xf32>
    tpu.vector_store %arg12[%c0_133, %c0_134], %236 {strides = array<i32>} : memref<16x512xf32, #tpu.memory_space<vmem>>, vector<16x128xf32>,
    %c0_135 = arith.constant 0 : index
    %c128 = arith.constant 128 : index
    %256 = vector.load %arg12[%c0_135, %c128] : memref<16x512xf32, #tpu.memory_space<vmem>>, vector<16x128xf32>
    tpu.vector_store %arg12[%c0_135, %c128], %242 {strides = array<i32>} : memref<16x512xf32, #tpu.memory_space<vmem>>, vector<16x128xf32>,
    %c0_136 = arith.constant 0 : index
    %c256 = arith.constant 256 : index
    %257 = vector.load %arg12[%c0_136, %c256] : memref<16x512xf32, #tpu.memory_space<vmem>>, vector<16x128xf32>
    tpu.vector_store %arg12[%c0_136, %c256], %248 {strides = array<i32>} : memref<16x512xf32, #tpu.memory_space<vmem>>, vector<16x128xf32>,
    %c0_137 = arith.constant 0 : index
    %c384 = arith.constant 384 : index
    %258 = vector.load %arg12[%c0_137, %c384] : memref<16x512xf32, #tpu.memory_space<vmem>>, vector<16x128xf32>
    tpu.vector_store %arg12[%c0_137, %c384], %254 {strides = array<i32>} : memref<16x512xf32, #tpu.memory_space<vmem>>, vector<16x128xf32>,
    return
  }
  func.func @transform_0(%arg0: i32) -> (i32, i32) {
    %c0_i32 = arith.constant 0 : i32
    %c0_i32_0 = arith.constant 0 : i32
    %c0_i32_1 = arith.constant 0 : i32
    return %c0_i32, %c0_i32_0 : i32, i32
  }
  func.func @transform_1(%arg0: i32) -> (i32, i32) {
    %c0_i32 = arith.constant 0 : i32
    %c0_i32_0 = arith.constant 0 : i32
    %c0_i32_1 = arith.constant 0 : i32
    return %c0_i32, %c0_i32_0 : i32, i32
  }
  func.func @transform_2(%arg0: i32) -> (i32, i32, i32) {
    %c0_i32 = arith.constant 0 : i32
    %c0_i32_0 = arith.constant 0 : i32
    %c0_i32_1 = arith.constant 0 : i32
    %c0_i32_2 = arith.constant 0 : i32
    return %c0_i32, %c0_i32_0, %c0_i32_1 : i32, i32, i32
  }
  func.func @transform_3(%arg0: i32) -> (i32, i32) {
    %c0_i32 = arith.constant 0 : i32
    %c0_i32_0 = arith.constant 0 : i32
    %c0_i32_1 = arith.constant 0 : i32
    return %c0_i32, %c0_i32_0 : i32, i32
  }
  func.func @transform_4(%arg0: i32) -> (i32, i32) {
    %c0_i32 = arith.constant 0 : i32
    %c0_i32_0 = arith.constant 0 : i32
    %c0_i32_1 = arith.constant 0 : i32
    return %c0_i32, %c0_i32_0 : i32, i32
  }
  func.func @transform_5(%arg0: i32) -> (i32, i32) {
    %c0_i32 = arith.constant 0 : i32
    %c0_i32_0 = arith.constant 0 : i32
    %c0_i32_1 = arith.constant 0 : i32
    return %c0_i32, %c0_i32_0 : i32, i32
  }
  func.func @transform_6(%arg0: i32) -> (i32, i32) {
    %c0_i32 = arith.constant 0 : i32
    %c0_i32_0 = arith.constant 0 : i32
    %c0_i32_1 = arith.constant 0 : i32
    return %c0_i32, %c0_i32_0 : i32, i32
  }
  func.func @transform_7(%arg0: i32) -> (i32, i32) {
    %c0_i32 = arith.constant 0 : i32
    %c0_i32_0 = arith.constant 0 : i32
    %c0_i32_1 = arith.constant 0 : i32
    return %c0_i32, %c0_i32_0 : i32, i32
  }
  func.func @transform_8(%arg0: i32) -> (i32, i32) {
    %c0_i32 = arith.constant 0 : i32
    %c0_i32_0 = arith.constant 0 : i32
    %c0_i32_1 = arith.constant 0 : i32
    return %c0_i32, %c0_i32_0 : i32, i32
  }
  func.func @transform_9(%arg0: i32) -> (i32, i32) {
    %c0_i32 = arith.constant 0 : i32
    %c0_i32_0 = arith.constant 0 : i32
    %c0_i32_1 = arith.constant 0 : i32
    return %c0_i32, %c0_i32_0 : i32, i32
  }
  func.func @transform_10(%arg0: i32) -> (i32, i32) {
    %c0_i32 = arith.constant 0 : i32
    %c0_i32_0 = arith.constant 0 : i32
    %c0_i32_1 = arith.constant 0 : i32
    return %c0_i32, %c0_i32_0 : i32, i32
  }
  func.func @transform_11(%arg0: i32) -> (i32, i32) {
    %c0_i32 = arith.constant 0 : i32
    %c0_i32_0 = arith.constant 0 : i32
    %c0_i32_1 = arith.constant 0 : i32
    return %c0_i32, %c0_i32_0 : i32, i32
  }
}

</mosaic_0001>

<llo_original>
// kernel: tpu_custom_call.1
$region0: #{tpu_custom_call.1}
  #allocation0 [shape = 'u32[]', space=smem, size = 0x4, offset = 0x4, fixed_abs, tag = 'smem constant byte address 0x4 - core index']
  #allocation1 [shape = 'u32[144,128]{1,0:T(1,128)}', space=vmem, size = 0x12000, scoped, tag = 'internal scratch']
  #allocation2 [shape = 'f32[8,256]{1,0:T(8,128)}', space=vmem, size = 0x2000, scoped, tag = 'scratch operand']
  %s0 = inlined_call_operand.vmem [shape: f32[32,128], index: 0, kind: input, shape index: {}]
  %s1 = inlined_call_operand.vmem [shape: f32[8,32], index: 1, kind: input, shape index: {}]
  %s2 = inlined_call_operand.vmem [shape: f32[9,8,8], index: 2, kind: input, shape index: {}]
  %s3 = inlined_call_operand.vmem [shape: f32[16,8], index: 3, kind: input, shape index: {}]
  %s4 = inlined_call_operand.vmem [shape: f32[4,128], index: 4, kind: input, shape index: {}]
  %s5 = inlined_call_operand.vmem [shape: f32[8,1], index: 5, kind: input, shape index: {}]
  %s6 = inlined_call_operand.vmem [shape: f32[8,1], index: 6, kind: input, shape index: {}]
  %s7 = inlined_call_operand.vmem [shape: f32[8,1], index: 7, kind: input, shape index: {}]
  %s8 = inlined_call_operand.vmem [shape: f32[8,1], index: 8, kind: input, shape index: {}]
  %s9 = inlined_call_operand.vmem [shape: f32[16,1], index: 9, kind: input, shape index: {}]
  %s10 = inlined_call_operand.vmem [shape: f32[16,1], index: 10, kind: input, shape index: {}]
  %s11 = inlined_call_operand.hbm [shape: f32[16,512], index: 11, kind: output, shape index: {}]
  %s12 = sld [smem:[#allocation0]]
  $region54: #{tpu_custom_call.1} parent=0
    _
  %s14 = ssub.s32 1, %s12
  %s15 = scalar_select 0, %s14, %s12
  $region1: #{tpu_custom_call.1} parent=0
    #allocation3 [shape = 'u8[32768]{0}', space=vmem, size = 0x8000, scoped, tag = 'output window, operand 0, single buffered']
    #allocation4 [shape = 's32[1]{0}', space=sflag, size = 0x4, scoped, tag = 'scoped memory for tpu_custom_call.1']
    %16 = vsyncpa [#allocation4], 0
    // Predicated region
    $region2: #{tpu_custom_call.1} parent=1 // pred_check
      _
    $region3: #{tpu_custom_call.1} parent=1 // pred_check_branch
      %18 = sbr.rel (0) target = $region5
    $region4: #{tpu_custom_call.1} parent=1 // pred_region
      _
    $region5: #{tpu_custom_call.1} parent=1 // pred_fallthru
      _
    // Predicated region
    $region6: #{tpu_custom_call.1} parent=1 // pred_check
      _
    $region7: #{tpu_custom_call.1} parent=1 // pred_check_branch
      %20 = sbr.rel (0) target = $region9
    $region8: #{tpu_custom_call.1} parent=1 // pred_region
      _
    $region9: #{tpu_custom_call.1} parent=1 // pred_fallthru
      _
    // Predicated region
    $region10: #{tpu_custom_call.1} parent=1 // pred_check
      _
    $region11: #{tpu_custom_call.1} parent=1 // pred_check_branch
      %22 = sbr.rel (0) target = $region13
    $region12: #{tpu_custom_call.1} parent=1 // pred_region
      _
    $region13: #{tpu_custom_call.1} parent=1 // pred_fallthru
      _
    // Predicated region
    $region14: #{tpu_custom_call.1} parent=1 // pred_check
      _
    $region15: #{tpu_custom_call.1} parent=1 // pred_check_branch
      %24 = sbr.rel (0) target = $region17
    $region16: #{tpu_custom_call.1} parent=1 // pred_region
      _
    $region17: #{tpu_custom_call.1} parent=1 // pred_fallthru
      _
    // Predicated region
    $region18: #{tpu_custom_call.1} parent=1 // pred_check
      _
    $region19: #{tpu_custom_call.1} parent=1 // pred_check_branch
      %26 = sbr.rel (0) target = $region21
    $region20: #{tpu_custom_call.1} parent=1 // pred_region
      _
    $region21: #{tpu_custom_call.1} parent=1 // pred_fallthru
      _
    // Predicated region
    $region22: #{tpu_custom_call.1} parent=1 // pred_check
      _
    $region23: #{tpu_custom_call.1} parent=1 // pred_check_branch
      %28 = sbr.rel (0) target = $region25
    $region24: #{tpu_custom_call.1} parent=1 // pred_region
      _
    $region25: #{tpu_custom_call.1} parent=1 // pred_fallthru
      _
    // Predicated region
    $region26: #{tpu_custom_call.1} parent=1 // pred_check
      _
    $region27: #{tpu_custom_call.1} parent=1 // pred_check_branch
      %30 = sbr.rel (0) target = $region29
    $region28: #{tpu_custom_call.1} parent=1 // pred_region
      _
    $region29: #{tpu_custom_call.1} parent=1 // pred_fallthru
      _
    // Predicated region
    $region30: #{tpu_custom_call.1} parent=1 // pred_check
      _
    $region31: #{tpu_custom_call.1} parent=1 // pred_check_branch
      %32 = sbr.rel (0) target = $region33
    $region32: #{tpu_custom_call.1} parent=1 // pred_region
      _
    $region33: #{tpu_custom_call.1} parent=1 // pred_fallthru
      _
    // Predicated region
    $region34: #{tpu_custom_call.1} parent=1 // pred_check
      _
    $region35: #{tpu_custom_call.1} parent=1 // pred_check_branch
      %34 = sbr.rel (0) target = $region37
    $region36: #{tpu_custom_call.1} parent=1 // pred_region
      _
    $region37: #{tpu_custom_call.1} parent=1 // pred_fallthru
      _
    // Predicated region
    $region38: #{tpu_custom_call.1} parent=1 // pred_check
      _
    $region39: #{tpu_custom_call.1} parent=1 // pred_check_branch
      %36 = sbr.rel (0) target = $region41
    $region40: #{tpu_custom_call.1} parent=1 // pred_region
      _
    $region41: #{tpu_custom_call.1} parent=1 // pred_fallthru
      _
    // Predicated region
    $region42: #{tpu_custom_call.1} parent=1 // pred_check
      _
    $region43: #{tpu_custom_call.1} parent=1 // pred_check_branch
      %38 = sbr.rel (0) target = $region45
    $region44: #{tpu_custom_call.1} parent=1 // pred_region
      _
    $region45: #{tpu_custom_call.1} parent=1 // pred_fallthru
      _
    %v39 = vld [vmem:[%s1] sm:$0xff]
    %v40 = vld [vmem:[%s0] sm:$0xff]
    %v41 = vld [vmem:[%s0 + $0x8] sm:$0xff]
    %v42 = vld [vmem:[%s0 + $0x10] sm:$0xff]
    %v43 = vld [vmem:[%s0 + $0x18] sm:$0xff]
    %vm44 = vcmask 261120
    %v46 = vsel %vm44, %v39, 0
    %48 = vmatprep.subr.mxu0 0.0
    %49 = vmatpush1.msra.mxu0 0.0
    %50 = vmatprep.subr.mxu0 0.0
    %51 = vmatpush1.msra.mxu0 0.0
    %52 = vmatprep.subr.mxu0 0.0
    %53 = vmatpush1.msra.mxu0 0.0
    %54 = vmatprep.subr.mxu0 0.0
    %55 = vmatpush1.msra.mxu0 0.0
    %56 = vmatprep.subr.mxu0 0.0
    %57 = vmatpush1.msra.mxu0 0.0
    %58 = vmatprep.subr.mxu0 0.0
    %59 = vmatpush1.msra.mxu0 0.0
    %60 = vmatprep.subr.mxu0 0.0
    %61 = vmatpush1.msra.mxu0 0.0
    %62 = vmatprep.subr.mxu0 0.0
    %63 = vmatpush1.msra.mxu0 0.0
    %64 = vmatprep.subr.mxu0 0.0
    %65 = vmatpush1.msra.mxu0 0.0
    %66 = vmatprep.subr.mxu0 0.0
    %67 = vmatpush1.msra.mxu0 0.0
    %68 = vmatprep.subr.mxu0 0.0
    %69 = vmatpush1.msra.mxu0 0.0
    %70 = vmatprep.subr.mxu0 0.0
    %71 = vmatpush1.msra.mxu0 0.0
    %72 = vmatprep.subr.mxu0 0.0
    %73 = vmatpush1.msra.mxu0 %v43
    %74 = vmatprep.subr.mxu0 0.0
    %75 = vmatpush1.msra.mxu0 %v42
    %76 = vmatprep.subr.mxu0 0.0
    %77 = vmatpush1.msra.mxu0 %v41
    %78 = vmatprep.subr.mxu0 0.0
    %79 = vmatpush1.msra.mxu0 %v40
    %80 = vmatprep.subr.mxu0 0.0
    %81 = vmatpush2.msra.mxu0 0.0
    %82 = vmatprep.subr.mxu0 0.0
    %83 = vmatpush2.msra.mxu0 0.0
    %84 = vmatprep.subr.mxu0 0.0
    %85 = vmatpush2.msra.mxu0 0.0
    %86 = vmatprep.subr.mxu0 0.0
    %87 = vmatpush2.msra.mxu0 0.0
    %88 = vmatprep.subr.mxu0 0.0
    %89 = vmatpush2.msra.mxu0 0.0
    %90 = vmatprep.subr.mxu0 0.0
    %91 = vmatpush2.msra.mxu0 0.0
    %92 = vmatprep.subr.mxu0 0.0
    %93 = vmatpush2.msra.mxu0 0.0
    %94 = vmatprep.subr.mxu0 0.0
    %95 = vmatpush2.msra.mxu0 0.0
    %96 = vmatprep.subr.mxu0 0.0
    %97 = vmatpush2.msra.mxu0 0.0
    %98 = vmatprep.subr.mxu0 0.0
    %99 = vmatpush2.msra.mxu0 0.0
    %100 = vmatprep.subr.mxu0 0.0
    %101 = vmatpush2.msra.mxu0 0.0
    %102 = vmatprep.subr.mxu0 0.0
    %103 = vmatpush2.msra.mxu0 0.0
    %104 = vmatprep.subr.mxu0 0.0
    %105 = vmatpush2.msra.mxu0 0.0
    %106 = vmatprep.subr.mxu0 0.0
    %107 = vmatpush2.msra.mxu0 0.0
    %108 = vmatprep.subr.mxu0 0.0
    %109 = vmatpush2.msra.mxu0 0.0
    %110 = vmatprep.subr.mxu0 0.0
    %111 = vmatpush2.msra.mxu0 0.0
    %112 = vmatprep.mubr.f32.mxu0 0.0
    %113 = vmatmul.mubr.f32.gmra.mxu0 %v46
    %v114 = vpop.f32.mrf.mxu0
    %v115 = vadd.f32 0.0, %v114
    %v116 = vpop.f32.mrf.mxu0
    %117 = vdwg.mxu0
    %v118 = vld [vmem:[%s5] sm:$0xff]
    %v119 = vld [vmem:[%s6] sm:$0xff]
    %120 = vadd.xlane.f32.xlu0 %v115
    %v121 = vpop.xlane.xlu0 %120
    %v122 = vadd.f32 %v121, 0.0
    %v123 = vmul.f32 %v122, 0.0078125
    %v124 = vsub.f32 %v115, %v123
    %v125 = vmul.f32 %v124, %v124
    %126 = vadd.xlane.f32.xlu0 %v125
    %v127 = vpop.xlane.xlu0 %126
    %v128 = vadd.f32 %v127, 0.0
    %v129 = vmul.f32 %v128, 0.0078125
    %v130 = vadd.f32 %v129, 1e-05
    %v131 = vrsqrt.pop %v130
    %v132 = vmul.f32 %v118, %v131
    %v133 = vmul.f32 %v123, %v132
    %v134 = vsub.f32 %v119, %v133
    %136 = vset.pattern.permute.xlu0 0
    %137 = vperm.xlu0 %136, %v132
    %v138 = vpop.permute.xlu0 %137
    %v140 = vmul.f32 %v115, %v138
    %142 = vset.pattern.permute.xlu0 0
    %143 = vperm.xlu0 %142, %v134
    %v144 = vpop.permute.xlu0 %143
    %v146 = vadd.f32 %v140, %v144
    %v147 = vmax.f32 %v146, 0.0
    %148 = vst [vmem:[#allocation2] sm:$0xff] 0.0
    %149 = vst [vmem:[#allocation2 + $0x8] sm:$0xff] 0.0
    %150 = vst [vmem:[#allocation2] sm:$0xff] %v147
    %v151 = vld [vmem:[#allocation2] sm:$0xff]
    %s152 = scalar_lea.vmem %s2, 32
    %v153 = vld [vmem:[%s152] sm:$0xff]
    %vm154 = vcmask 64512
    %v156 = vsel %vm154, %v153, 0
    %158 = vmatprep.subr.mxu0 0.0
    %159 = vmatpush1.msra.mxu0 0.0
    %160 = vmatprep.subr.mxu0 0.0
    %161 = vmatpush1.msra.mxu0 0.0
    %162 = vmatprep.subr.mxu0 0.0
    %163 = vmatpush1.msra.mxu0 0.0
    %164 = vmatprep.subr.mxu0 0.0
    %165 = vmatpush1.msra.mxu0 0.0
    %166 = vmatprep.subr.mxu0 0.0
    %167 = vmatpush1.msra.mxu0 0.0
    %168 = vmatprep.subr.mxu0 0.0
    %169 = vmatpush1.msra.mxu0 0.0
    %170 = vmatprep.subr.mxu0 0.0
    %171 = vmatpush1.msra.mxu0 0.0
    %172 = vmatprep.subr.mxu0 0.0
    %173 = vmatpush1.msra.mxu0 0.0
    %174 = vmatprep.subr.mxu0 0.0
    %175 = vmatpush1.msra.mxu0 0.0
    %176 = vmatprep.subr.mxu0 0.0
    %177 = vmatpush1.msra.mxu0 0.0
    %178 = vmatprep.subr.mxu0 0.0
    %179 = vmatpush1.msra.mxu0 0.0
    %180 = vmatprep.subr.mxu0 0.0
    %181 = vmatpush1.msra.mxu0 0.0
    %182 = vmatprep.subr.mxu0 0.0
    %183 = vmatpush1.msra.mxu0 0.0
    %184 = vmatprep.subr.mxu0 0.0
    %185 = vmatpush1.msra.mxu0 0.0
    %186 = vmatprep.subr.mxu0 0.0
    %187 = vmatpush1.msra.mxu0 0.0
    %188 = vmatprep.subr.mxu0 0.0
    %189 = vmatpush1.msra.mxu0 %v151
    %190 = vmatprep.subr.mxu0 0.0
    %191 = vmatpush2.msra.mxu0 0.0
    %192 = vmatprep.subr.mxu0 0.0
    %193 = vmatpush2.msra.mxu0 0.0
    %194 = vmatprep.subr.mxu0 0.0
    %195 = vmatpush2.msra.mxu0 0.0
    %196 = vmatprep.subr.mxu0 0.0
    %197 = vmatpush2.msra.mxu0 0.0
    %198 = vmatprep.subr.mxu0 0.0
    %199 = vmatpush2.msra.mxu0 0.0
    %200 = vmatprep.subr.mxu0 0.0
    %201 = vmatpush2.msra.mxu0 0.0
    %202 = vmatprep.subr.mxu0 0.0
    %203 = vmatpush2.msra.mxu0 0.0
    %204 = vmatprep.subr.mxu0 0.0
    %205 = vmatpush2.msra.mxu0 0.0
    %206 = vmatprep.subr.mxu0 0.0
    %207 = vmatpush2.msra.mxu0 0.0
    %208 = vmatprep.subr.mxu0 0.0
    %209 = vmatpush2.msra.mxu0 0.0
    %210 = vmatprep.subr.mxu0 0.0
    %211 = vmatpush2.msra.mxu0 0.0
    %212 = vmatprep.subr.mxu0 0.0
    %213 = vmatpush2.msra.mxu0 0.0
    %214 = vmatprep.subr.mxu0 0.0
    %215 = vmatpush2.msra.mxu0 0.0
    %216 = vmatprep.subr.mxu0 0.0
    %217 = vmatpush2.msra.mxu0 0.0
    %218 = vmatprep.subr.mxu0 0.0
    %219 = vmatpush2.msra.mxu0 0.0
    %220 = vmatprep.subr.mxu0 0.0
    %221 = vmatpush2.msra.mxu0 0.0
    %222 = vmatprep.mubr.f32.mxu0 0.0
    %223 = vmatmul.mubr.f32.gmra.mxu0 %v156
    %v224 = vpop.f32.mrf.mxu0
    %v225 = vadd.f32 0.0, %v224
    %v226 = vpop.f32.mrf.mxu0
    %227 = vdwg.mxu0
    %v228 = vld [vmem:[#allocation2] sm:$0xff]
    %v229 = vld [vmem:[#allocation2 + $0x8] sm:$0xff]
    %v230 = vld [vmem:[%s4 + $0x1] sm:$0x1]
    %v231 = vlaneseq
    %v232 = vshrl.u32 %v231, 7
    %v233 = vsub.s32 0, %v232
    %v234 = vrot.slane %v230, %v233
    %236 = vrot.lane.b32.xlu0 %v234, 1
    %v237 = vpop.permute.xlu0 %236
    %v239 = vmul.f32 %v228, %v237
    %v240 = vmul.f32 %v229, %v237
    %s241 = scalar_lea.vmem %s2, 24
    %v242 = vld [vmem:[%s241] sm:$0xff]
    %s243 = scalar_lea.vmem %s2, 40
    %v244 = vld [vmem:[%s243] sm:$0xff]
    %v246 = vsel %vm154, %v244, 0
    %248 = vmatprep.subr.mxu0 0.0
    %249 = vmatpush1.msra.mxu0 0.0
    %250 = vmatprep.subr.mxu0 0.0
    %251 = vmatpush1.msra.mxu0 0.0
    %252 = vmatprep.subr.mxu0 0.0
    %253 = vmatpush1.msra.mxu0 0.0
    %254 = vmatprep.subr.mxu0 0.0
    %255 = vmatpush1.msra.mxu0 0.0
    %256 = vmatprep.subr.mxu0 0.0
    %257 = vmatpush1.msra.mxu0 0.0
    %258 = vmatprep.subr.mxu0 0.0
    %259 = vmatpush1.msra.mxu0 0.0
    %260 = vmatprep.subr.mxu0 0.0
    %261 = vmatpush1.msra.mxu0 0.0
    %262 = vmatprep.subr.mxu0 0.0
    %263 = vmatpush1.msra.mxu0 0.0
    %264 = vmatprep.subr.mxu0 0.0
    %265 = vmatpush1.msra.mxu0 0.0
    %266 = vmatprep.subr.mxu0 0.0
    %267 = vmatpush1.msra.mxu0 0.0
    %268 = vmatprep.subr.mxu0 0.0
    %269 = vmatpush1.msra.mxu0 0.0
    %270 = vmatprep.subr.mxu0 0.0
    %271 = vmatpush1.msra.mxu0 0.0
    %272 = vmatprep.subr.mxu0 0.0
    %273 = vmatpush1.msra.mxu0 0.0
    %274 = vmatprep.subr.mxu0 0.0
    %275 = vmatpush1.msra.mxu0 0.0
    %276 = vmatprep.subr.mxu0 0.0
    %277 = vmatpush1.msra.mxu0 0.0
    %278 = vmatprep.subr.mxu0 0.0
    %279 = vmatpush1.msra.mxu0 %v151
    %280 = vmatprep.subr.mxu0 0.0
    %281 = vmatpush2.msra.mxu0 0.0
    %282 = vmatprep.subr.mxu0 0.0
    %283 = vmatpush2.msra.mxu0 0.0
    %284 = vmatprep.subr.mxu0 0.0
    %285 = vmatpush2.msra.mxu0 0.0
    %286 = vmatprep.subr.mxu0 0.0
    %287 = vmatpush2.msra.mxu0 0.0
    %288 = vmatprep.subr.mxu0 0.0
    %289 = vmatpush2.msra.mxu0 0.0
    %290 = vmatprep.subr.mxu0 0.0
    %291 = vmatpush2.msra.mxu0 0.0
    %292 = vmatprep.subr.mxu0 0.0
    %293 = vmatpush2.msra.mxu0 0.0
    %294 = vmatprep.subr.mxu0 0.0
    %295 = vmatpush2.msra.mxu0 0.0
    %296 = vmatprep.subr.mxu0 0.0
    %297 = vmatpush2.msra.mxu0 0.0
    %298 = vmatprep.subr.mxu0 0.0
    %299 = vmatpush2.msra.mxu0 0.0
    %300 = vmatprep.subr.mxu0 0.0
    %301 = vmatpush2.msra.mxu0 0.0
    %302 = vmatprep.subr.mxu0 0.0
    %303 = vmatpush2.msra.mxu0 0.0
    %304 = vmatprep.subr.mxu0 0.0
    %305 = vmatpush2.msra.mxu0 0.0
    %306 = vmatprep.subr.mxu0 0.0
    %307 = vmatpush2.msra.mxu0 0.0
    %308 = vmatprep.subr.mxu0 0.0
    %309 = vmatpush2.msra.mxu0 0.0
    %310 = vmatprep.subr.mxu0 0.0
    %311 = vmatpush2.msra.mxu0 0.0
    %312 = vmatprep.mubr.f32.mxu0 0.0
    %313 = vmatmul.mubr.f32.gmra.mxu0 %v246
    %v314 = vpop.f32.mrf.mxu0
    %v315 = vadd.f32 0.0, %v314
    %v316 = vpop.f32.mrf.mxu0
    %317 = vdwg.mxu0
    %320 = vrot.lane.b32.xlu0 %v239, 127
    %v321 = vpop.permute.xlu0 %320
    %322 = vrot.lane.b32.xlu0 %v240, 127
    %v323 = vpop.permute.xlu0 %322
    %vm324 = vcmask 1039360
    %v325 = vsel %vm324, %v321, %v323
    %v328 = vsel %vm154, %v242, 0
    %330 = vmatprep.subr.mxu0 0.0
    %331 = vmatpush1.msra.mxu0 0.0
    %332 = vmatprep.subr.mxu0 0.0
    %333 = vmatpush1.msra.mxu0 0.0
    %334 = vmatprep.subr.mxu0 0.0
    %335 = vmatpush1.msra.mxu0 0.0
    %336 = vmatprep.subr.mxu0 0.0
    %337 = vmatpush1.msra.mxu0 0.0
    %338 = vmatprep.subr.mxu0 0.0
    %339 = vmatpush1.msra.mxu0 0.0
    %340 = vmatprep.subr.mxu0 0.0
    %341 = vmatpush1.msra.mxu0 0.0
    %342 = vmatprep.subr.mxu0 0.0
    %343 = vmatpush1.msra.mxu0 0.0
    %344 = vmatprep.subr.mxu0 0.0
    %345 = vmatpush1.msra.mxu0 0.0
    %346 = vmatprep.subr.mxu0 0.0
    %347 = vmatpush1.msra.mxu0 0.0
    %348 = vmatprep.subr.mxu0 0.0
    %349 = vmatpush1.msra.mxu0 0.0
    %350 = vmatprep.subr.mxu0 0.0
    %351 = vmatpush1.msra.mxu0 0.0
    %352 = vmatprep.subr.mxu0 0.0
    %353 = vmatpush1.msra.mxu0 0.0
    %354 = vmatprep.subr.mxu0 0.0
    %355 = vmatpush1.msra.mxu0 0.0
    %356 = vmatprep.subr.mxu0 0.0
    %357 = vmatpush1.msra.mxu0 0.0
    %358 = vmatprep.subr.mxu0 0.0
    %359 = vmatpush1.msra.mxu0 0.0
    %360 = vmatprep.subr.mxu0 0.0
    %361 = vmatpush1.msra.mxu0 %v325
    %362 = vmatprep.subr.mxu0 0.0
    %363 = vmatpush2.msra.mxu0 0.0
    %364 = vmatprep.subr.mxu0 0.0
    %365 = vmatpush2.msra.mxu0 0.0
    %366 = vmatprep.subr.mxu0 0.0
    %367 = vmatpush2.msra.mxu0 0.0
    %368 = vmatprep.subr.mxu0 0.0
    %369 = vmatpush2.msra.mxu0 0.0
    %370 = vmatprep.subr.mxu0 0.0
    %371 = vmatpush2.msra.mxu0 0.0
    %372 = vmatprep.subr.mxu0 0.0
    %373 = vmatpush2.msra.mxu0 0.0
    %374 = vmatprep.subr.mxu0 0.0
    %375 = vmatpush2.msra.mxu0 0.0
    %376 = vmatprep.subr.mxu0 0.0
    %377 = vmatpush2.msra.mxu0 0.0
    %378 = vmatprep.subr.mxu0 0.0
    %379 = vmatpush2.msra.mxu0 0.0
    %380 = vmatprep.subr.mxu0 0.0
    %381 = vmatpush2.msra.mxu0 0.0
    %382 = vmatprep.subr.mxu0 0.0
    %383 = vmatpush2.msra.mxu0 0.0
    %384 = vmatprep.subr.mxu0 0.0
    %385 = vmatpush2.msra.mxu0 0.0
    %386 = vmatprep.subr.mxu0 0.0
    %387 = vmatpush2.msra.mxu0 0.0
    %388 = vmatprep.subr.mxu0 0.0
    %389 = vmatpush2.msra.mxu0 0.0
    %390 = vmatprep.subr.mxu0 0.0
    %391 = vmatpush2.msra.mxu0 0.0
    %392 = vmatprep.subr.mxu0 0.0
    %393 = vmatpush2.msra.mxu0 0.0
    %394 = vmatprep.mubr.f32.mxu0 0.0
    %395 = vmatmul.mubr.f32.gmra.mxu0 %v328
    %v396 = vpop.f32.mrf.mxu0
    %v397 = vadd.f32 %v315, %v396
    %v398 = vpop.f32.mrf.mxu0
    %399 = vdwg.mxu0
    %v400 = vld [vmem:[%s4 + $0x2] sm:$0x1]
    %v401 = vlaneseq
    %v402 = vshrl.u32 %v401, 7
    %v403 = vsub.s32 0, %v402
    %v404 = vrot.slane %v400, %v403
    %406 = vrot.lane.b32.xlu0 %v404, 8
    %v407 = vpop.permute.xlu0 %406
    %v409 = vmul.f32 %v228, %v407
    %v410 = vmul.f32 %v229, %v407
    %s411 = scalar_lea.vmem %s2, 8
    %v412 = vld [vmem:[%s411] sm:$0xff]
    %s413 = scalar_lea.vmem %s2, 56
    %v414 = vld [vmem:[%s413] sm:$0xff]
    %v416 = vsel %vm154, %v414, 0
    %418 = vmatprep.subr.mxu0 0.0
    %419 = vmatpush1.msra.mxu0 0.0
    %420 = vmatprep.subr.mxu0 0.0
    %421 = vmatpush1.msra.mxu0 0.0
    %422 = vmatprep.subr.mxu0 0.0
    %423 = vmatpush1.msra.mxu0 0.0
    %424 = vmatprep.subr.mxu0 0.0
    %425 = vmatpush1.msra.mxu0 0.0
    %426 = vmatprep.subr.mxu0 0.0
    %427 = vmatpush1.msra.mxu0 0.0
    %428 = vmatprep.subr.mxu0 0.0
    %429 = vmatpush1.msra.mxu0 0.0
    %430 = vmatprep.subr.mxu0 0.0
    %431 = vmatpush1.msra.mxu0 0.0
    %432 = vmatprep.subr.mxu0 0.0
    %433 = vmatpush1.msra.mxu0 0.0
    %434 = vmatprep.subr.mxu0 0.0
    %435 = vmatpush1.msra.mxu0 0.0
    %436 = vmatprep.subr.mxu0 0.0
    %437 = vmatpush1.msra.mxu0 0.0
    %438 = vmatprep.subr.mxu0 0.0
    %439 = vmatpush1.msra.mxu0 0.0
    %440 = vmatprep.subr.mxu0 0.0
    %441 = vmatpush1.msra.mxu0 0.0
    %442 = vmatprep.subr.mxu0 0.0
    %443 = vmatpush1.msra.mxu0 0.0
    %444 = vmatprep.subr.mxu0 0.0
    %445 = vmatpush1.msra.mxu0 0.0
    %446 = vmatprep.subr.mxu0 0.0
    %447 = vmatpush1.msra.mxu0 0.0
    %448 = vmatprep.subr.mxu0 0.0
    %449 = vmatpush1.msra.mxu0 %v151
    %450 = vmatprep.subr.mxu0 0.0
    %451 = vmatpush2.msra.mxu0 0.0
    %452 = vmatprep.subr.mxu0 0.0
    %453 = vmatpush2.msra.mxu0 0.0
    %454 = vmatprep.subr.mxu0 0.0
    %455 = vmatpush2.msra.mxu0 0.0
    %456 = vmatprep.subr.mxu0 0.0
    %457 = vmatpush2.msra.mxu0 0.0
    %458 = vmatprep.subr.mxu0 0.0
    %459 = vmatpush2.msra.mxu0 0.0
    %460 = vmatprep.subr.mxu0 0.0
    %461 = vmatpush2.msra.mxu0 0.0
    %462 = vmatprep.subr.mxu0 0.0
    %463 = vmatpush2.msra.mxu0 0.0
    %464 = vmatprep.subr.mxu0 0.0
    %465 = vmatpush2.msra.mxu0 0.0
    %466 = vmatprep.subr.mxu0 0.0
    %467 = vmatpush2.msra.mxu0 0.0
    %468 = vmatprep.subr.mxu0 0.0
    %469 = vmatpush2.msra.mxu0 0.0
    %470 = vmatprep.subr.mxu0 0.0
    %471 = vmatpush2.msra.mxu0 0.0
    %472 = vmatprep.subr.mxu0 0.0
    %473 = vmatpush2.msra.mxu0 0.0
    %474 = vmatprep.subr.mxu0 0.0
    %475 = vmatpush2.msra.mxu0 0.0
    %476 = vmatprep.subr.mxu0 0.0
    %477 = vmatpush2.msra.mxu0 0.0
    %478 = vmatprep.subr.mxu0 0.0
    %479 = vmatpush2.msra.mxu0 0.0
    %480 = vmatprep.subr.mxu0 0.0
    %481 = vmatpush2.msra.mxu0 0.0
    %482 = vmatprep.mubr.f32.mxu0 0.0
    %483 = vmatmul.mubr.f32.gmra.mxu0 %v416
    %v484 = vpop.f32.mrf.mxu0
    %v485 = vadd.f32 0.0, %v484
    %v486 = vpop.f32.mrf.mxu0
    %487 = vdwg.mxu0
    %490 = vrot.lane.b32.xlu0 %v409, 120
    %v491 = vpop.permute.xlu0 %490
    %492 = vrot.lane.b32.xlu0 %v410, 120
    %v493 = vpop.permute.xlu0 %492
    %vm494 = vcmask 982016
    %v495 = vsel %vm494, %v491, %v493
    %v498 = vsel %vm154, %v412, 0
    %500 = vmatprep.subr.mxu0 0.0
    %501 = vmatpush1.msra.mxu0 0.0
    %502 = vmatprep.subr.mxu0 0.0
    %503 = vmatpush1.msra.mxu0 0.0
    %504 = vmatprep.subr.mxu0 0.0
    %505 = vmatpush1.msra.mxu0 0.0
    %506 = vmatprep.subr.mxu0 0.0
    %507 = vmatpush1.msra.mxu0 0.0
    %508 = vmatprep.subr.mxu0 0.0
    %509 = vmatpush1.msra.mxu0 0.0
    %510 = vmatprep.subr.mxu0 0.0
    %511 = vmatpush1.msra.mxu0 0.0
    %512 = vmatprep.subr.mxu0 0.0
    %513 = vmatpush1.msra.mxu0 0.0
    %514 = vmatprep.subr.mxu0 0.0
    %515 = vmatpush1.msra.mxu0 0.0
    %516 = vmatprep.subr.mxu0 0.0
    %517 = vmatpush1.msra.mxu0 0.0
    %518 = vmatprep.subr.mxu0 0.0
    %519 = vmatpush1.msra.mxu0 0.0
    %520 = vmatprep.subr.mxu0 0.0
    %521 = vmatpush1.msra.mxu0 0.0
    %522 = vmatprep.subr.mxu0 0.0
    %523 = vmatpush1.msra.mxu0 0.0
    %524 = vmatprep.subr.mxu0 0.0
    %525 = vmatpush1.msra.mxu0 0.0
    %526 = vmatprep.subr.mxu0 0.0
    %527 = vmatpush1.msra.mxu0 0.0
    %528 = vmatprep.subr.mxu0 0.0
    %529 = vmatpush1.msra.mxu0 0.0
    %530 = vmatprep.subr.mxu0 0.0
    %531 = vmatpush1.msra.mxu0 %v495
    %532 = vmatprep.subr.mxu0 0.0
    %533 = vmatpush2.msra.mxu0 0.0
    %534 = vmatprep.subr.mxu0 0.0
    %535 = vmatpush2.msra.mxu0 0.0
    %536 = vmatprep.subr.mxu0 0.0
    %537 = vmatpush2.msra.mxu0 0.0
    %538 = vmatprep.subr.mxu0 0.0
    %539 = vmatpush2.msra.mxu0 0.0
    %540 = vmatprep.subr.mxu0 0.0
    %541 = vmatpush2.msra.mxu0 0.0
    %542 = vmatprep.subr.mxu0 0.0
    %543 = vmatpush2.msra.mxu0 0.0
    %544 = vmatprep.subr.mxu0 0.0
    %545 = vmatpush2.msra.mxu0 0.0
    %546 = vmatprep.subr.mxu0 0.0
    %547 = vmatpush2.msra.mxu0 0.0
    %548 = vmatprep.subr.mxu0 0.0
    %549 = vmatpush2.msra.mxu0 0.0
    %550 = vmatprep.subr.mxu0 0.0
    %551 = vmatpush2.msra.mxu0 0.0
    %552 = vmatprep.subr.mxu0 0.0
    %553 = vmatpush2.msra.mxu0 0.0
    %554 = vmatprep.subr.mxu0 0.0
    %555 = vmatpush2.msra.mxu0 0.0
    %556 = vmatprep.subr.mxu0 0.0
    %557 = vmatpush2.msra.mxu0 0.0
    %558 = vmatprep.subr.mxu0 0.0
    %559 = vmatpush2.msra.mxu0 0.0
    %560 = vmatprep.subr.mxu0 0.0
    %561 = vmatpush2.msra.mxu0 0.0
    %562 = vmatprep.subr.mxu0 0.0
    %563 = vmatpush2.msra.mxu0 0.0
    %564 = vmatprep.mubr.f32.mxu0 0.0
    %565 = vmatmul.mubr.f32.gmra.mxu0 %v498
    %v566 = vpop.f32.mrf.mxu0
    %v567 = vadd.f32 %v485, %v566
    %v568 = vpop.f32.mrf.mxu0
    %569 = vdwg.mxu0
    %v570 = vld [vmem:[%s4 + $0x3] sm:$0x1]
    %v571 = vlaneseq
    %v572 = vshrl.u32 %v571, 7
    %v573 = vsub.s32 0, %v572
    %v574 = vrot.slane %v570, %v573
    %576 = vrot.lane.b32.xlu0 %v574, 9
    %v577 = vpop.permute.xlu0 %576
    %v579 = vmul.f32 %v228, %v577
    %v580 = vmul.f32 %v229, %v577
    %v581 = vld [vmem:[%s2] sm:$0xff]
    %s582 = scalar_lea.vmem %s2, 16
    %v583 = vld [vmem:[%s582] sm:$0xff]
    %v585 = vsel %vm154, %v583, 0
    %587 = vmatprep.subr.mxu0 0.0
    %588 = vmatpush1.msra.mxu0 0.0
    %589 = vmatprep.subr.mxu0 0.0
    %590 = vmatpush1.msra.mxu0 0.0
    %591 = vmatprep.subr.mxu0 0.0
    %592 = vmatpush1.msra.mxu0 0.0
    %593 = vmatprep.subr.mxu0 0.0
    %594 = vmatpush1.msra.mxu0 0.0
    %595 = vmatprep.subr.mxu0 0.0
    %596 = vmatpush1.msra.mxu0 0.0
    %597 = vmatprep.subr.mxu0 0.0
    %598 = vmatpush1.msra.mxu0 0.0
    %599 = vmatprep.subr.mxu0 0.0
    %600 = vmatpush1.msra.mxu0 0.0
    %601 = vmatprep.subr.mxu0 0.0
    %602 = vmatpush1.msra.mxu0 0.0
    %603 = vmatprep.subr.mxu0 0.0
    %604 = vmatpush1.msra.mxu0 0.0
    %605 = vmatprep.subr.mxu0 0.0
    %606 = vmatpush1.msra.mxu0 0.0
    %607 = vmatprep.subr.mxu0 0.0
    %608 = vmatpush1.msra.mxu0 0.0
    %609 = vmatprep.subr.mxu0 0.0
    %610 = vmatpush1.msra.mxu0 0.0
    %611 = vmatprep.subr.mxu0 0.0
    %612 = vmatpush1.msra.mxu0 0.0
    %613 = vmatprep.subr.mxu0 0.0
    %614 = vmatpush1.msra.mxu0 0.0
    %615 = vmatprep.subr.mxu0 0.0
    %616 = vmatpush1.msra.mxu0 0.0
    %617 = vmatprep.subr.mxu0 0.0
    %618 = vmatpush1.msra.mxu0 %v495
    %619 = vmatprep.subr.mxu0 0.0
    %620 = vmatpush2.msra.mxu0 0.0
    %621 = vmatprep.subr.mxu0 0.0
    %622 = vmatpush2.msra.mxu0 0.0
    %623 = vmatprep.subr.mxu0 0.0
    %624 = vmatpush2.msra.mxu0 0.0
    %625 = vmatprep.subr.mxu0 0.0
    %626 = vmatpush2.msra.mxu0 0.0
    %627 = vmatprep.subr.mxu0 0.0
    %628 = vmatpush2.msra.mxu0 0.0
    %629 = vmatprep.subr.mxu0 0.0
    %630 = vmatpush2.msra.mxu0 0.0
    %631 = vmatprep.subr.mxu0 0.0
    %632 = vmatpush2.msra.mxu0 0.0
    %633 = vmatprep.subr.mxu0 0.0
    %634 = vmatpush2.msra.mxu0 0.0
    %635 = vmatprep.subr.mxu0 0.0
    %636 = vmatpush2.msra.mxu0 0.0
    %637 = vmatprep.subr.mxu0 0.0
    %638 = vmatpush2.msra.mxu0 0.0
    %639 = vmatprep.subr.mxu0 0.0
    %640 = vmatpush2.msra.mxu0 0.0
    %641 = vmatprep.subr.mxu0 0.0
    %642 = vmatpush2.msra.mxu0 0.0
    %643 = vmatprep.subr.mxu0 0.0
    %644 = vmatpush2.msra.mxu0 0.0
    %645 = vmatprep.subr.mxu0 0.0
    %646 = vmatpush2.msra.mxu0 0.0
    %647 = vmatprep.subr.mxu0 0.0
    %648 = vmatpush2.msra.mxu0 0.0
    %649 = vmatprep.subr.mxu0 0.0
    %650 = vmatpush2.msra.mxu0 0.0
    %651 = vmatprep.mubr.f32.mxu0 0.0
    %652 = vmatmul.mubr.f32.gmra.mxu0 %v585
    %v653 = vpop.f32.mrf.mxu0
    %v654 = vadd.f32 0.0, %v653
    %v655 = vpop.f32.mrf.mxu0
    %656 = vdwg.mxu0
    %659 = vrot.lane.b32.xlu0 %v579, 119
    %v660 = vpop.permute.xlu0 %659
    %661 = vrot.lane.b32.xlu0 %v580, 119
    %v662 = vpop.permute.xlu0 %661
    %vm663 = vcmask 973824
    %v664 = vsel %vm663, %v660, %v662
    %v667 = vsel %vm154, %v581, 0
    %669 = vmatprep.subr.mxu0 0.0
    %670 = vmatpush1.msra.mxu0 0.0
    %671 = vmatprep.subr.mxu0 0.0
    %672 = vmatpush1.msra.mxu0 0.0
    %673 = vmatprep.subr.mxu0 0.0
    %674 = vmatpush1.msra.mxu0 0.0
    %675 = vmatprep.subr.mxu0 0.0
    %676 = vmatpush1.msra.mxu0 0.0
    %677 = vmatprep.subr.mxu0 0.0
    %678 = vmatpush1.msra.mxu0 0.0
    %679 = vmatprep.subr.mxu0 0.0
    %680 = vmatpush1.msra.mxu0 0.0
    %681 = vmatprep.subr.mxu0 0.0
    %682 = vmatpush1.msra.mxu0 0.0
    %683 = vmatprep.subr.mxu0 0.0
    %684 = vmatpush1.msra.mxu0 0.0
    %685 = vmatprep.subr.mxu0 0.0
    %686 = vmatpush1.msra.mxu0 0.0
    %687 = vmatprep.subr.mxu0 0.0
    %688 = vmatpush1.msra.mxu0 0.0
    %689 = vmatprep.subr.mxu0 0.0
    %690 = vmatpush1.msra.mxu0 0.0
    %691 = vmatprep.subr.mxu0 0.0
    %692 = vmatpush1.msra.mxu0 0.0
    %693 = vmatprep.subr.mxu0 0.0
    %694 = vmatpush1.msra.mxu0 0.0
    %695 = vmatprep.subr.mxu0 0.0
    %696 = vmatpush1.msra.mxu0 0.0
    %697 = vmatprep.subr.mxu0 0.0
    %698 = vmatpush1.msra.mxu0 0.0
    %699 = vmatprep.subr.mxu0 0.0
    %700 = vmatpush1.msra.mxu0 %v664
    %701 = vmatprep.subr.mxu0 0.0
    %702 = vmatpush2.msra.mxu0 0.0
    %703 = vmatprep.subr.mxu0 0.0
    %704 = vmatpush2.msra.mxu0 0.0
    %705 = vmatprep.subr.mxu0 0.0
    %706 = vmatpush2.msra.mxu0 0.0
    %707 = vmatprep.subr.mxu0 0.0
    %708 = vmatpush2.msra.mxu0 0.0
    %709 = vmatprep.subr.mxu0 0.0
    %710 = vmatpush2.msra.mxu0 0.0
    %711 = vmatprep.subr.mxu0 0.0
    %712 = vmatpush2.msra.mxu0 0.0
    %713 = vmatprep.subr.mxu0 0.0
    %714 = vmatpush2.msra.mxu0 0.0
    %715 = vmatprep.subr.mxu0 0.0
    %716 = vmatpush2.msra.mxu0 0.0
    %717 = vmatprep.subr.mxu0 0.0
    %718 = vmatpush2.msra.mxu0 0.0
    %719 = vmatprep.subr.mxu0 0.0
    %720 = vmatpush2.msra.mxu0 0.0
    %721 = vmatprep.subr.mxu0 0.0
    %722 = vmatpush2.msra.mxu0 0.0
    %723 = vmatprep.subr.mxu0 0.0
    %724 = vmatpush2.msra.mxu0 0.0
    %725 = vmatprep.subr.mxu0 0.0
    %726 = vmatpush2.msra.mxu0 0.0
    %727 = vmatprep.subr.mxu0 0.0
    %728 = vmatpush2.msra.mxu0 0.0
    %729 = vmatprep.subr.mxu0 0.0
    %730 = vmatpush2.msra.mxu0 0.0
    %731 = vmatprep.subr.mxu0 0.0
    %732 = vmatpush2.msra.mxu0 0.0
    %733 = vmatprep.mubr.f32.mxu0 0.0
    %734 = vmatmul.mubr.f32.gmra.mxu0 %v667
    %v735 = vpop.f32.mrf.mxu0
    %v736 = vadd.f32 %v654, %v735
    %v737 = vpop.f32.mrf.mxu0
    %738 = vdwg.mxu0
    %s739 = scalar_lea.vmem %s2, 48
    %v740 = vld [vmem:[%s739] sm:$0xff]
    %v742 = vsel %vm154, %v740, 0
    %744 = vmatprep.subr.mxu0 0.0
    %745 = vmatpush1.msra.mxu0 0.0
    %746 = vmatprep.subr.mxu0 0.0
    %747 = vmatpush1.msra.mxu0 0.0
    %748 = vmatprep.subr.mxu0 0.0
    %749 = vmatpush1.msra.mxu0 0.0
    %750 = vmatprep.subr.mxu0 0.0
    %751 = vmatpush1.msra.mxu0 0.0
    %752 = vmatprep.subr.mxu0 0.0
    %753 = vmatpush1.msra.mxu0 0.0
    %754 = vmatprep.subr.mxu0 0.0
    %755 = vmatpush1.msra.mxu0 0.0
    %756 = vmatprep.subr.mxu0 0.0
    %757 = vmatpush1.msra.mxu0 0.0
    %758 = vmatprep.subr.mxu0 0.0
    %759 = vmatpush1.msra.mxu0 0.0
    %760 = vmatprep.subr.mxu0 0.0
    %761 = vmatpush1.msra.mxu0 0.0
    %762 = vmatprep.subr.mxu0 0.0
    %763 = vmatpush1.msra.mxu0 0.0
    %764 = vmatprep.subr.mxu0 0.0
    %765 = vmatpush1.msra.mxu0 0.0
    %766 = vmatprep.subr.mxu0 0.0
    %767 = vmatpush1.msra.mxu0 0.0
    %768 = vmatprep.subr.mxu0 0.0
    %769 = vmatpush1.msra.mxu0 0.0
    %770 = vmatprep.subr.mxu0 0.0
    %771 = vmatpush1.msra.mxu0 0.0
    %772 = vmatprep.subr.mxu0 0.0
    %773 = vmatpush1.msra.mxu0 0.0
    %774 = vmatprep.subr.mxu0 0.0
    %775 = vmatpush1.msra.mxu0 %v325
    %776 = vmatprep.subr.mxu0 0.0
    %777 = vmatpush2.msra.mxu0 0.0
    %778 = vmatprep.subr.mxu0 0.0
    %779 = vmatpush2.msra.mxu0 0.0
    %780 = vmatprep.subr.mxu0 0.0
    %781 = vmatpush2.msra.mxu0 0.0
    %782 = vmatprep.subr.mxu0 0.0
    %783 = vmatpush2.msra.mxu0 0.0
    %784 = vmatprep.subr.mxu0 0.0
    %785 = vmatpush2.msra.mxu0 0.0
    %786 = vmatprep.subr.mxu0 0.0
    %787 = vmatpush2.msra.mxu0 0.0
    %788 = vmatprep.subr.mxu0 0.0
    %789 = vmatpush2.msra.mxu0 0.0
    %790 = vmatprep.subr.mxu0 0.0
    %791 = vmatpush2.msra.mxu0 0.0
    %792 = vmatprep.subr.mxu0 0.0
    %793 = vmatpush2.msra.mxu0 0.0
    %794 = vmatprep.subr.mxu0 0.0
    %795 = vmatpush2.msra.mxu0 0.0
    %796 = vmatprep.subr.mxu0 0.0
    %797 = vmatpush2.msra.mxu0 0.0
    %798 = vmatprep.subr.mxu0 0.0
    %799 = vmatpush2.msra.mxu0 0.0
    %800 = vmatprep.subr.mxu0 0.0
    %801 = vmatpush2.msra.mxu0 0.0
    %802 = vmatprep.subr.mxu0 0.0
    %803 = vmatpush2.msra.mxu0 0.0
    %804 = vmatprep.subr.mxu0 0.0
    %805 = vmatpush2.msra.mxu0 0.0
    %806 = vmatprep.subr.mxu0 0.0
    %807 = vmatpush2.msra.mxu0 0.0
    %808 = vmatprep.mubr.f32.mxu0 0.0
    %809 = vmatmul.mubr.f32.gmra.mxu0 %v742
    %v810 = vpop.f32.mrf.mxu0
    %v811 = vadd.f32 0.0, %v810
    %v812 = vpop.f32.mrf.mxu0
    %813 = vdwg.mxu0
    %v814 = vadd.f32 %v736, %v811
    %s815 = scalar_lea.vmem %s2, 64
    %v816 = vld [vmem:[%s815] sm:$0xff]
    %v818 = vsel %vm154, %v816, 0
    %820 = vmatprep.subr.mxu0 0.0
    %821 = vmatpush1.msra.mxu0 0.0
    %822 = vmatprep.subr.mxu0 0.0
    %823 = vmatpush1.msra.mxu0 0.0
    %824 = vmatprep.subr.mxu0 0.0
    %825 = vmatpush1.msra.mxu0 0.0
    %826 = vmatprep.subr.mxu0 0.0
    %827 = vmatpush1.msra.mxu0 0.0
    %828 = vmatprep.subr.mxu0 0.0
    %829 = vmatpush1.msra.mxu0 0.0
    %830 = vmatprep.subr.mxu0 0.0
    %831 = vmatpush1.msra.mxu0 0.0
    %832 = vmatprep.subr.mxu0 0.0
    %833 = vmatpush1.msra.mxu0 0.0
    %834 = vmatprep.subr.mxu0 0.0
    %835 = vmatpush1.msra.mxu0 0.0
    %836 = vmatprep.subr.mxu0 0.0
    %837 = vmatpush1.msra.mxu0 0.0
    %838 = vmatprep.subr.mxu0 0.0
    %839 = vmatpush1.msra.mxu0 0.0
    %840 = vmatprep.subr.mxu0 0.0
    %841 = vmatpush1.msra.mxu0 0.0
    %842 = vmatprep.subr.mxu0 0.0
    %843 = vmatpush1.msra.mxu0 0.0
    %844 = vmatprep.subr.mxu0 0.0
    %845 = vmatpush1.msra.mxu0 0.0
    %846 = vmatprep.subr.mxu0 0.0
    %847 = vmatpush1.msra.mxu0 0.0
    %848 = vmatprep.subr.mxu0 0.0
    %849 = vmatpush1.msra.mxu0 0.0
    %850 = vmatprep.subr.mxu0 0.0
    %851 = vmatpush1.msra.mxu0 %v151
    %852 = vmatprep.subr.mxu0 0.0
    %853 = vmatpush2.msra.mxu0 0.0
    %854 = vmatprep.subr.mxu0 0.0
    %855 = vmatpush2.msra.mxu0 0.0
    %856 = vmatprep.subr.mxu0 0.0
    %857 = vmatpush2.msra.mxu0 0.0
    %858 = vmatprep.subr.mxu0 0.0
    %859 = vmatpush2.msra.mxu0 0.0
    %860 = vmatprep.subr.mxu0 0.0
    %861 = vmatpush2.msra.mxu0 0.0
    %862 = vmatprep.subr.mxu0 0.0
    %863 = vmatpush2.msra.mxu0 0.0
    %864 = vmatprep.subr.mxu0 0.0
    %865 = vmatpush2.msra.mxu0 0.0
    %866 = vmatprep.subr.mxu0 0.0
    %867 = vmatpush2.msra.mxu0 0.0
    %868 = vmatprep.subr.mxu0 0.0
    %869 = vmatpush2.msra.mxu0 0.0
    %870 = vmatprep.subr.mxu0 0.0
    %871 = vmatpush2.msra.mxu0 0.0
    %872 = vmatprep.subr.mxu0 0.0
    %873 = vmatpush2.msra.mxu0 0.0
    %874 = vmatprep.subr.mxu0 0.0
    %875 = vmatpush2.msra.mxu0 0.0
    %876 = vmatprep.subr.mxu0 0.0
    %877 = vmatpush2.msra.mxu0 0.0
    %878 = vmatprep.subr.mxu0 0.0
    %879 = vmatpush2.msra.mxu0 0.0
    %880 = vmatprep.subr.mxu0 0.0
    %881 = vmatpush2.msra.mxu0 0.0
    %882 = vmatprep.subr.mxu0 0.0
    %883 = vmatpush2.msra.mxu0 0.0
    %884 = vmatprep.mubr.f32.mxu0 0.0
    %885 = vmatmul.mubr.f32.gmra.mxu0 %v818
    %v886 = vpop.f32.mrf.mxu0
    %v887 = vadd.f32 0.0, %v886
    %v888 = vpop.f32.mrf.mxu0
    %889 = vdwg.mxu0
    %v890 = vadd.f32 %v814, %v887
    %v891 = vld [vmem:[%s7] sm:$0xff]
    %v892 = vld [vmem:[%s8] sm:$0xff]
    %893 = vadd.xlane.f32.xlu0 %v225
    %v894 = vpop.xlane.xlu0 %893
    %v895 = vadd.f32 %v894, 0.0
    %896 = vadd.xlane.f32.xlu0 %v397
    %v897 = vpop.xlane.xlu0 %896
    %v898 = vadd.f32 %v895, %v897
    %899 = vadd.xlane.f32.xlu0 %v567
    %v900 = vpop.xlane.xlu0 %899
    %v901 = vadd.f32 %v898, %v900
    %902 = vadd.xlane.f32.xlu0 %v890
    %v903 = vpop.xlane.xlu0 %902
    %v904 = vadd.f32 %v901, %v903
    %v905 = vmul.f32 %v904, 0.001953125
    %v906 = vsub.f32 %v225, %v905
    %v907 = vmul.f32 %v906, %v906
    %908 = vadd.xlane.f32.xlu0 %v907
    %v909 = vpop.xlane.xlu0 %908
    %v910 = vadd.f32 %v909, 0.0
    %v911 = vsub.f32 %v397, %v905
    %v912 = vmul.f32 %v911, %v911
    %913 = vadd.xlane.f32.xlu0 %v912
    %v914 = vpop.xlane.xlu0 %913
    %v915 = vadd.f32 %v910, %v914
    %v916 = vsub.f32 %v567, %v905
    %v917 = vmul.f32 %v916, %v916
    %918 = vadd.xlane.f32.xlu0 %v917
    %v919 = vpop.xlane.xlu0 %918
    %v920 = vadd.f32 %v915, %v919
    %v921 = vsub.f32 %v890, %v905
    %v922 = vmul.f32 %v921, %v921
    %923 = vadd.xlane.f32.xlu0 %v922
    %v924 = vpop.xlane.xlu0 %923
    %v925 = vadd.f32 %v920, %v924
    %v926 = vmul.f32 %v925, 0.001953125
    %v927 = vadd.f32 %v926, 1e-05
    %v928 = vrsqrt.pop %v927
    %v929 = vmul.f32 %v891, %v928
    %v930 = vmul.f32 %v905, %v929
    %v931 = vsub.f32 %v892, %v930
    %933 = vset.pattern.permute.xlu0 0
    %934 = vperm.xlu0 %933, %v929
    %v935 = vpop.permute.xlu0 %934
    %v937 = vmul.f32 %v225, %v935
    %939 = vset.pattern.permute.xlu0 0
    %940 = vperm.xlu0 %939, %v931
    %v941 = vpop.permute.xlu0 %940
    %v943 = vadd.f32 %v937, %v941
    %v944 = vmax.f32 %v943, 0.0
    %v945 = vmul.f32 %v397, %v935
    %v946 = vadd.f32 %v945, %v941
    %v947 = vmax.f32 %v946, 0.0
    %v948 = vmul.f32 %v567, %v935
    %v949 = vadd.f32 %v948, %v941
    %v950 = vmax.f32 %v949, 0.0
    %v951 = vmul.f32 %v890, %v935
    %v952 = vadd.f32 %v951, %v941
    %v953 = vmax.f32 %v952, 0.0
    %v954 = vld [vmem:[%s3] sm:$0xff]
    %v955 = vld [vmem:[%s3 + $0x8] sm:$0xff]
    %v957 = vsel %vm154, %v954, 0
    %v960 = vsel %vm154, %v955, 0
    %962 = vmatprep.subr.mxu0 0.0
    %963 = vmatpush1.msra.mxu0 0.0
    %964 = vmatprep.subr.mxu0 0.0
    %965 = vmatpush1.msra.mxu0 0.0
    %966 = vmatprep.subr.mxu0 0.0
    %967 = vmatpush1.msra.mxu0 0.0
    %968 = vmatprep.subr.mxu0 0.0
    %969 = vmatpush1.msra.mxu0 0.0
    %970 = vmatprep.subr.mxu0 0.0
    %971 = vmatpush1.msra.mxu0 0.0
    %972 = vmatprep.subr.mxu0 0.0
    %973 = vmatpush1.msra.mxu0 0.0
    %974 = vmatprep.subr.mxu0 0.0
    %975 = vmatpush1.msra.mxu0 0.0
    %976 = vmatprep.subr.mxu0 0.0
    %977 = vmatpush1.msra.mxu0 0.0
    %978 = vmatprep.subr.mxu0 0.0
    %979 = vmatpush1.msra.mxu0 0.0
    %980 = vmatprep.subr.mxu0 0.0
    %981 = vmatpush1.msra.mxu0 0.0
    %982 = vmatprep.subr.mxu0 0.0
    %983 = vmatpush1.msra.mxu0 0.0
    %984 = vmatprep.subr.mxu0 0.0
    %985 = vmatpush1.msra.mxu0 0.0
    %986 = vmatprep.subr.mxu0 0.0
    %987 = vmatpush1.msra.mxu0 0.0
    %988 = vmatprep.subr.mxu0 0.0
    %989 = vmatpush1.msra.mxu0 0.0
    %990 = vmatprep.subr.mxu0 0.0
    %991 = vmatpush1.msra.mxu0 0.0
    %992 = vmatprep.subr.mxu0 0.0
    %993 = vmatpush1.msra.mxu0 %v944
    %994 = vmatprep.subr.mxu0 0.0
    %995 = vmatpush2.msra.mxu0 0.0
    %996 = vmatprep.subr.mxu0 0.0
    %997 = vmatpush2.msra.mxu0 0.0
    %998 = vmatprep.subr.mxu0 0.0
    %999 = vmatpush2.msra.mxu0 0.0
    %1000 = vmatprep.subr.mxu0 0.0
    %1001 = vmatpush2.msra.mxu0 0.0
    %1002 = vmatprep.subr.mxu0 0.0
    %1003 = vmatpush2.msra.mxu0 0.0
    %1004 = vmatprep.subr.mxu0 0.0
    %1005 = vmatpush2.msra.mxu0 0.0
    %1006 = vmatprep.subr.mxu0 0.0
    %1007 = vmatpush2.msra.mxu0 0.0
    %1008 = vmatprep.subr.mxu0 0.0
    %1009 = vmatpush2.msra.mxu0 0.0
    %1010 = vmatprep.subr.mxu0 0.0
    %1011 = vmatpush2.msra.mxu0 0.0
    %1012 = vmatprep.subr.mxu0 0.0
    %1013 = vmatpush2.msra.mxu0 0.0
    %1014 = vmatprep.subr.mxu0 0.0
    %1015 = vmatpush2.msra.mxu0 0.0
    %1016 = vmatprep.subr.mxu0 0.0
    %1017 = vmatpush2.msra.mxu0 0.0
    %1018 = vmatprep.subr.mxu0 0.0
    %1019 = vmatpush2.msra.mxu0 0.0
    %1020 = vmatprep.subr.mxu0 0.0
    %1021 = vmatpush2.msra.mxu0 0.0
    %1022 = vmatprep.subr.mxu0 0.0
    %1023 = vmatpush2.msra.mxu0 0.0
    %1024 = vmatprep.subr.mxu0 0.0
    %1025 = vmatpush2.msra.mxu0 0.0
    %1026 = vmatprep.mubr.f32.mxu0 0.0
    %1027 = vmatmul.mubr.f32.gmra.mxu0 %v957
    %v1028 = vpop.f32.mrf.mxu0
    %v1029 = vadd.f32 0.0, %v1028
    %v1030 = vpop.f32.mrf.mxu0
    %1031 = vmatprep.mubr.f32.mxu0 0.0
    %1032 = vmatmul.mubr.f32.gmra.mxu0 %v960
    %v1033 = vpop.f32.mrf.mxu0
    %v1034 = vadd.f32 0.0, %v1033
    %v1035 = vpop.f32.mrf.mxu0
    %1036 = vdwg.mxu0
    %1037 = vmatprep.subr.mxu0 0.0
    %1038 = vmatpush1.msra.mxu0 0.0
    %1039 = vmatprep.subr.mxu0 0.0
    %1040 = vmatpush1.msra.mxu0 0.0
    %1041 = vmatprep.subr.mxu0 0.0
    %1042 = vmatpush1.msra.mxu0 0.0
    %1043 = vmatprep.subr.mxu0 0.0
    %1044 = vmatpush1.msra.mxu0 0.0
    %1045 = vmatprep.subr.mxu0 0.0
    %1046 = vmatpush1.msra.mxu0 0.0
    %1047 = vmatprep.subr.mxu0 0.0
    %1048 = vmatpush1.msra.mxu0 0.0
    %1049 = vmatprep.subr.mxu0 0.0
    %1050 = vmatpush1.msra.mxu0 0.0
    %1051 = vmatprep.subr.mxu0 0.0
    %1052 = vmatpush1.msra.mxu0 0.0
    %1053 = vmatprep.subr.mxu0 0.0
    %1054 = vmatpush1.msra.mxu0 0.0
    %1055 = vmatprep.subr.mxu0 0.0
    %1056 = vmatpush1.msra.mxu0 0.0
    %1057 = vmatprep.subr.mxu0 0.0
    %1058 = vmatpush1.msra.mxu0 0.0
    %1059 = vmatprep.subr.mxu0 0.0
    %1060 = vmatpush1.msra.mxu0 0.0
    %1061 = vmatprep.subr.mxu0 0.0
    %1062 = vmatpush1.msra.mxu0 0.0
    %1063 = vmatprep.subr.mxu0 0.0
    %1064 = vmatpush1.msra.mxu0 0.0
    %1065 = vmatprep.subr.mxu0 0.0
    %1066 = vmatpush1.msra.mxu0 0.0
    %1067 = vmatprep.subr.mxu0 0.0
    %1068 = vmatpush1.msra.mxu0 %v947
    %1069 = vmatprep.subr.mxu0 0.0
    %1070 = vmatpush2.msra.mxu0 0.0
    %1071 = vmatprep.subr.mxu0 0.0
    %1072 = vmatpush2.msra.mxu0 0.0
    %1073 = vmatprep.subr.mxu0 0.0
    %1074 = vmatpush2.msra.mxu0 0.0
    %1075 = vmatprep.subr.mxu0 0.0
    %1076 = vmatpush2.msra.mxu0 0.0
    %1077 = vmatprep.subr.mxu0 0.0
    %1078 = vmatpush2.msra.mxu0 0.0
    %1079 = vmatprep.subr.mxu0 0.0
    %1080 = vmatpush2.msra.mxu0 0.0
    %1081 = vmatprep.subr.mxu0 0.0
    %1082 = vmatpush2.msra.mxu0 0.0
    %1083 = vmatprep.subr.mxu0 0.0
    %1084 = vmatpush2.msra.mxu0 0.0
    %1085 = vmatprep.subr.mxu0 0.0
    %1086 = vmatpush2.msra.mxu0 0.0
    %1087 = vmatprep.subr.mxu0 0.0
    %1088 = vmatpush2.msra.mxu0 0.0
    %1089 = vmatprep.subr.mxu0 0.0
    %1090 = vmatpush2.msra.mxu0 0.0
    %1091 = vmatprep.subr.mxu0 0.0
    %1092 = vmatpush2.msra.mxu0 0.0
    %1093 = vmatprep.subr.mxu0 0.0
    %1094 = vmatpush2.msra.mxu0 0.0
    %1095 = vmatprep.subr.mxu0 0.0
    %1096 = vmatpush2.msra.mxu0 0.0
    %1097 = vmatprep.subr.mxu0 0.0
    %1098 = vmatpush2.msra.mxu0 0.0
    %1099 = vmatprep.subr.mxu0 0.0
    %1100 = vmatpush2.msra.mxu0 0.0
    %1101 = vmatprep.mubr.f32.mxu0 0.0
    %1102 = vmatmul.mubr.f32.gmra.mxu0 %v957
    %v1103 = vpop.f32.mrf.mxu0
    %v1104 = vadd.f32 0.0, %v1103
    %v1105 = vpop.f32.mrf.mxu0
    %1106 = vmatprep.mubr.f32.mxu0 0.0
    %1107 = vmatmul.mubr.f32.gmra.mxu0 %v960
    %v1108 = vpop.f32.mrf.mxu0
    %v1109 = vadd.f32 0.0, %v1108
    %v1110 = vpop.f32.mrf.mxu0
    %1111 = vdwg.mxu0
    %1112 = vmatprep.subr.mxu0 0.0
    %1113 = vmatpush1.msra.mxu0 0.0
    %1114 = vmatprep.subr.mxu0 0.0
    %1115 = vmatpush1.msra.mxu0 0.0
    %1116 = vmatprep.subr.mxu0 0.0
    %1117 = vmatpush1.msra.mxu0 0.0
    %1118 = vmatprep.subr.mxu0 0.0
    %1119 = vmatpush1.msra.mxu0 0.0
    %1120 = vmatprep.subr.mxu0 0.0
    %1121 = vmatpush1.msra.mxu0 0.0
    %1122 = vmatprep.subr.mxu0 0.0
    %1123 = vmatpush1.msra.mxu0 0.0
    %1124 = vmatprep.subr.mxu0 0.0
    %1125 = vmatpush1.msra.mxu0 0.0
    %1126 = vmatprep.subr.mxu0 0.0
    %1127 = vmatpush1.msra.mxu0 0.0
    %1128 = vmatprep.subr.mxu0 0.0
    %1129 = vmatpush1.msra.mxu0 0.0
    %1130 = vmatprep.subr.mxu0 0.0
    %1131 = vmatpush1.msra.mxu0 0.0
    %1132 = vmatprep.subr.mxu0 0.0
    %1133 = vmatpush1.msra.mxu0 0.0
    %1134 = vmatprep.subr.mxu0 0.0
    %1135 = vmatpush1.msra.mxu0 0.0
    %1136 = vmatprep.subr.mxu0 0.0
    %1137 = vmatpush1.msra.mxu0 0.0
    %1138 = vmatprep.subr.mxu0 0.0
    %1139 = vmatpush1.msra.mxu0 0.0
    %1140 = vmatprep.subr.mxu0 0.0
    %1141 = vmatpush1.msra.mxu0 0.0
    %1142 = vmatprep.subr.mxu0 0.0
    %1143 = vmatpush1.msra.mxu0 %v950
    %1144 = vmatprep.subr.mxu0 0.0
    %1145 = vmatpush2.msra.mxu0 0.0
    %1146 = vmatprep.subr.mxu0 0.0
    %1147 = vmatpush2.msra.mxu0 0.0
    %1148 = vmatprep.subr.mxu0 0.0
    %1149 = vmatpush2.msra.mxu0 0.0
    %1150 = vmatprep.subr.mxu0 0.0
    %1151 = vmatpush2.msra.mxu0 0.0
    %1152 = vmatprep.subr.mxu0 0.0
    %1153 = vmatpush2.msra.mxu0 0.0
    %1154 = vmatprep.subr.mxu0 0.0
    %1155 = vmatpush2.msra.mxu0 0.0
    %1156 = vmatprep.subr.mxu0 0.0
    %1157 = vmatpush2.msra.mxu0 0.0
    %1158 = vmatprep.subr.mxu0 0.0
    %1159 = vmatpush2.msra.mxu0 0.0
    %1160 = vmatprep.subr.mxu0 0.0
    %1161 = vmatpush2.msra.mxu0 0.0
    %1162 = vmatprep.subr.mxu0 0.0
    %1163 = vmatpush2.msra.mxu0 0.0
    %1164 = vmatprep.subr.mxu0 0.0
    %1165 = vmatpush2.msra.mxu0 0.0
    %1166 = vmatprep.subr.mxu0 0.0
    %1167 = vmatpush2.msra.mxu0 0.0
    %1168 = vmatprep.subr.mxu0 0.0
    %1169 = vmatpush2.msra.mxu0 0.0
    %1170 = vmatprep.subr.mxu0 0.0
    %1171 = vmatpush2.msra.mxu0 0.0
    %1172 = vmatprep.subr.mxu0 0.0
    %1173 = vmatpush2.msra.mxu0 0.0
    %1174 = vmatprep.subr.mxu0 0.0
    %1175 = vmatpush2.msra.mxu0 0.0
    %1176 = vmatprep.mubr.f32.mxu0 0.0
    %1177 = vmatmul.mubr.f32.gmra.mxu0 %v957
    %v1178 = vpop.f32.mrf.mxu0
    %v1179 = vadd.f32 0.0, %v1178
    %v1180 = vpop.f32.mrf.mxu0
    %1181 = vmatprep.mubr.f32.mxu0 0.0
    %1182 = vmatmul.mubr.f32.gmra.mxu0 %v960
    %v1183 = vpop.f32.mrf.mxu0
    %v1184 = vadd.f32 0.0, %v1183
    %v1185 = vpop.f32.mrf.mxu0
    %1186 = vdwg.mxu0
    %1187 = vmatprep.subr.mxu0 0.0
    %1188 = vmatpush1.msra.mxu0 0.0
    %1189 = vmatprep.subr.mxu0 0.0
    %1190 = vmatpush1.msra.mxu0 0.0
    %1191 = vmatprep.subr.mxu0 0.0
    %1192 = vmatpush1.msra.mxu0 0.0
    %1193 = vmatprep.subr.mxu0 0.0
    %1194 = vmatpush1.msra.mxu0 0.0
    %1195 = vmatprep.subr.mxu0 0.0
    %1196 = vmatpush1.msra.mxu0 0.0
    %1197 = vmatprep.subr.mxu0 0.0
    %1198 = vmatpush1.msra.mxu0 0.0
    %1199 = vmatprep.subr.mxu0 0.0
    %1200 = vmatpush1.msra.mxu0 0.0
    %1201 = vmatprep.subr.mxu0 0.0
    %1202 = vmatpush1.msra.mxu0 0.0
    %1203 = vmatprep.subr.mxu0 0.0
    %1204 = vmatpush1.msra.mxu0 0.0
    %1205 = vmatprep.subr.mxu0 0.0
    %1206 = vmatpush1.msra.mxu0 0.0
    %1207 = vmatprep.subr.mxu0 0.0
    %1208 = vmatpush1.msra.mxu0 0.0
    %1209 = vmatprep.subr.mxu0 0.0
    %1210 = vmatpush1.msra.mxu0 0.0
    %1211 = vmatprep.subr.mxu0 0.0
    %1212 = vmatpush1.msra.mxu0 0.0
    %1213 = vmatprep.subr.mxu0 0.0
    %1214 = vmatpush1.msra.mxu0 0.0
    %1215 = vmatprep.subr.mxu0 0.0
    %1216 = vmatpush1.msra.mxu0 0.0
    %1217 = vmatprep.subr.mxu0 0.0
    %1218 = vmatpush1.msra.mxu0 %v953
    %1219 = vmatprep.subr.mxu0 0.0
    %1220 = vmatpush2.msra.mxu0 0.0
    %1221 = vmatprep.subr.mxu0 0.0
    %1222 = vmatpush2.msra.mxu0 0.0
    %1223 = vmatprep.subr.mxu0 0.0
    %1224 = vmatpush2.msra.mxu0 0.0
    %1225 = vmatprep.subr.mxu0 0.0
    %1226 = vmatpush2.msra.mxu0 0.0
    %1227 = vmatprep.subr.mxu0 0.0
    %1228 = vmatpush2.msra.mxu0 0.0
    %1229 = vmatprep.subr.mxu0 0.0
    %1230 = vmatpush2.msra.mxu0 0.0
    %1231 = vmatprep.subr.mxu0 0.0
    %1232 = vmatpush2.msra.mxu0 0.0
    %1233 = vmatprep.subr.mxu0 0.0
    %1234 = vmatpush2.msra.mxu0 0.0
    %1235 = vmatprep.subr.mxu0 0.0
    %1236 = vmatpush2.msra.mxu0 0.0
    %1237 = vmatprep.subr.mxu0 0.0
    %1238 = vmatpush2.msra.mxu0 0.0
    %1239 = vmatprep.subr.mxu0 0.0
    %1240 = vmatpush2.msra.mxu0 0.0
    %1241 = vmatprep.subr.mxu0 0.0
    %1242 = vmatpush2.msra.mxu0 0.0
    %1243 = vmatprep.subr.mxu0 0.0
    %1244 = vmatpush2.msra.mxu0 0.0
    %1245 = vmatprep.subr.mxu0 0.0
    %1246 = vmatpush2.msra.mxu0 0.0
    %1247 = vmatprep.subr.mxu0 0.0
    %1248 = vmatpush2.msra.mxu0 0.0
    %1249 = vmatprep.subr.mxu0 0.0
    %1250 = vmatpush2.msra.mxu0 0.0
    %1251 = vmatprep.mubr.f32.mxu0 0.0
    %1252 = vmatmul.mubr.f32.gmra.mxu0 %v957
    %v1253 = vpop.f32.mrf.mxu0
    %v1254 = vadd.f32 0.0, %v1253
    %v1255 = vpop.f32.mrf.mxu0
    %1256 = vmatprep.mubr.f32.mxu0 0.0
    %1257 = vmatmul.mubr.f32.gmra.mxu0 %v960
    %v1258 = vpop.f32.mrf.mxu0
    %v1259 = vadd.f32 0.0, %v1258
    %v1260 = vpop.f32.mrf.mxu0
    %1261 = vdwg.mxu0
    %v1262 = vld [vmem:[%s9] sm:$0xff]
    %v1263 = vld [vmem:[%s9 + $0x8] sm:$0xff]
    %v1264 = vld [vmem:[%s10] sm:$0xff]
    %v1265 = vld [vmem:[%s10 + $0x8] sm:$0xff]
    %1266 = vadd.xlane.f32.xlu0 %v1029
    %v1267 = vpop.xlane.xlu0 %1266
    %1268 = vadd.xlane.f32.xlu0 %v1034
    %v1269 = vpop.xlane.xlu0 %1268
    %v1270 = vadd.f32 %v1267, 0.0
    %v1271 = vadd.f32 %v1269, 0.0
    %1272 = vadd.xlane.f32.xlu0 %v1104
    %v1273 = vpop.xlane.xlu0 %1272
    %1274 = vadd.xlane.f32.xlu0 %v1109
    %v1275 = vpop.xlane.xlu0 %1274
    %v1276 = vadd.f32 %v1270, %v1273
    %v1277 = vadd.f32 %v1271, %v1275
    %1278 = vadd.xlane.f32.xlu0 %v1179
    %v1279 = vpop.xlane.xlu0 %1278
    %1280 = vadd.xlane.f32.xlu0 %v1184
    %v1281 = vpop.xlane.xlu0 %1280
    %v1282 = vadd.f32 %v1276, %v1279
    %v1283 = vadd.f32 %v1277, %v1281
    %1284 = vadd.xlane.f32.xlu0 %v1254
    %v1285 = vpop.xlane.xlu0 %1284
    %1286 = vadd.xlane.f32.xlu0 %v1259
    %v1287 = vpop.xlane.xlu0 %1286
    %v1288 = vadd.f32 %v1282, %v1285
    %v1289 = vadd.f32 %v1283, %v1287
    %v1290 = vmul.f32 %v1288, 0.001953125
    %v1291 = vmul.f32 %v1289, 0.001953125
    %v1292 = vsub.f32 %v1029, %v1290
    %v1293 = vsub.f32 %v1034, %v1291
    %v1294 = vmul.f32 %v1292, %v1292
    %v1295 = vmul.f32 %v1293, %v1293
    %1296 = vadd.xlane.f32.xlu0 %v1294
    %v1297 = vpop.xlane.xlu0 %1296
    %1298 = vadd.xlane.f32.xlu0 %v1295
    %v1299 = vpop.xlane.xlu0 %1298
    %v1300 = vadd.f32 %v1297, 0.0
    %v1301 = vadd.f32 %v1299, 0.0
    %v1302 = vsub.f32 %v1104, %v1290
    %v1303 = vsub.f32 %v1109, %v1291
    %v1304 = vmul.f32 %v1302, %v1302
    %v1305 = vmul.f32 %v1303, %v1303
    %1306 = vadd.xlane.f32.xlu0 %v1304
    %v1307 = vpop.xlane.xlu0 %1306
    %1308 = vadd.xlane.f32.xlu0 %v1305
    %v1309 = vpop.xlane.xlu0 %1308
    %v1310 = vadd.f32 %v1300, %v1307
    %v1311 = vadd.f32 %v1301, %v1309
    %v1312 = vsub.f32 %v1179, %v1290
    %v1313 = vsub.f32 %v1184, %v1291
    %v1314 = vmul.f32 %v1312, %v1312
    %v1315 = vmul.f32 %v1313, %v1313
    %1316 = vadd.xlane.f32.xlu0 %v1314
    %v1317 = vpop.xlane.xlu0 %1316
    %1318 = vadd.xlane.f32.xlu0 %v1315
    %v1319 = vpop.xlane.xlu0 %1318
    %v1320 = vadd.f32 %v1310, %v1317
    %v1321 = vadd.f32 %v1311, %v1319
    %v1322 = vsub.f32 %v1254, %v1290
    %v1323 = vsub.f32 %v1259, %v1291
    %v1324 = vmul.f32 %v1322, %v1322
    %v1325 = vmul.f32 %v1323, %v1323
    %1326 = vadd.xlane.f32.xlu0 %v1324
    %v1327 = vpop.xlane.xlu0 %1326
    %1328 = vadd.xlane.f32.xlu0 %v1325
    %v1329 = vpop.xlane.xlu0 %1328
    %v1330 = vadd.f32 %v1320, %v1327
    %v1331 = vadd.f32 %v1321, %v1329
    %v1332 = vmul.f32 %v1330, 0.001953125
    %v1333 = vmul.f32 %v1331, 0.001953125
    %v1334 = vadd.f32 %v1332, 1e-05
    %v1335 = vadd.f32 %v1333, 1e-05
    %v1336 = vrsqrt.pop %v1334
    %v1337 = vrsqrt.pop %v1335
    %v1338 = vmul.f32 %v1262, %v1336
    %v1339 = vmul.f32 %v1263, %v1337
    %v1340 = vmul.f32 %v1290, %v1338
    %v1341 = vmul.f32 %v1291, %v1339
    %v1342 = vsub.f32 %v1264, %v1340
    %v1343 = vsub.f32 %v1265, %v1341
    %1345 = vset.pattern.permute.xlu0 0
    %1346 = vperm.xlu0 %1345, %v1338
    %v1347 = vpop.permute.xlu0 %1346
    %1350 = vset.pattern.permute.xlu0 0
    %1351 = vperm.xlu0 %1350, %v1339
    %v1352 = vpop.permute.xlu0 %1351
    %v1354 = vmul.f32 %v1029, %v1347
    %v1355 = vmul.f32 %v1034, %v1352
    %1357 = vset.pattern.permute.xlu0 0
    %1358 = vperm.xlu0 %1357, %v1342
    %v1359 = vpop.permute.xlu0 %1358
    %1362 = vset.pattern.permute.xlu0 0
    %1363 = vperm.xlu0 %1362, %v1343
    %v1364 = vpop.permute.xlu0 %1363
    %v1366 = vadd.f32 %v1354, %v1359
    %v1367 = vadd.f32 %v1355, %v1364
    %v1368 = vmax.f32 %v1366, 0.0
    %v1369 = vmax.f32 %v1367, 0.0
    %v1370 = vmul.f32 %v1104, %v1347
    %v1371 = vmul.f32 %v1109, %v1352
    %v1372 = vadd.f32 %v1370, %v1359
    %v1373 = vadd.f32 %v1371, %v1364
    %v1374 = vmax.f32 %v1372, 0.0
    %v1375 = vmax.f32 %v1373, 0.0
    %v1376 = vmul.f32 %v1179, %v1347
    %v1377 = vmul.f32 %v1184, %v1352
    %v1378 = vadd.f32 %v1376, %v1359
    %v1379 = vadd.f32 %v1377, %v1364
    %v1380 = vmax.f32 %v1378, 0.0
    %v1381 = vmax.f32 %v1379, 0.0
    %v1382 = vmul.f32 %v1254, %v1347
    %v1383 = vmul.f32 %v1259, %v1352
    %v1384 = vadd.f32 %v1382, %v1359
    %v1385 = vadd.f32 %v1383, %v1364
    %v1386 = vmax.f32 %v1384, 0.0
    %v1387 = vmax.f32 %v1385, 0.0
    %1388 = vst [vmem:[#allocation3] sm:$0xff] %v1368
    %1389 = vst [vmem:[#allocation3 + $0x20] sm:$0xff] %v1369
    %1390 = vst [vmem:[#allocation3 + $0x8] sm:$0xff] %v1374
    %1391 = vst [vmem:[#allocation3 + $0x28] sm:$0xff] %v1375
    %1392 = vst [vmem:[#allocation3 + $0x10] sm:$0xff] %v1380
    %1393 = vst [vmem:[#allocation3 + $0x30] sm:$0xff] %v1381
    %1394 = vst [vmem:[#allocation3 + $0x18] sm:$0xff] %v1386
    %1395 = vst [vmem:[#allocation3 + $0x38] sm:$0xff] %v1387
    // Predicated region
    $region46: #{tpu_custom_call.1} parent=1 // pred_check
      _
    $region47: #{tpu_custom_call.1} parent=1 // pred_check_branch
      %1397 = sbr.rel (0) target = $region49
    $region48: #{tpu_custom_call.1} parent=1 // pred_region
      %s1399 = ssub.s32 1024, 1024
      %1400 = vsyncadd [#allocation4], %s1399
      %s1401 = sshll.u32 [#allocation3], 4
      %s1402 = int_to_ptr.vmem [resolvable:$true] %s1401
      %1407 = dma.vmem_to_hbm [thread:$0]  %s1402, 1024, %s11, [#allocation4], 512, 512, 32
    $region49: #{tpu_custom_call.1} parent=1 // pred_fallthru
      _
    // Predicated region
    $region50: #{tpu_custom_call.1} parent=1 // pred_check
      _
    $region51: #{tpu_custom_call.1} parent=1 // pred_check_branch
      %1409 = sbr.rel (0) target = $region53
    $region52: #{tpu_custom_call.1} parent=1 // pred_region
      %1410 = dma.done [#allocation4], 1024
    $region53: #{tpu_custom_call.1} parent=1 // pred_fallthru
      _
    %1411 = vsyncpa [#allocation4], 1

</llo_original>
